<compile_context>
chip_gen: v7x
topology: tpu7x:2x2x1
jax: 0.10.0
libtpu: 0.0.40
codegen_flags: <defaults>
</compile_context>

<pallas_src>
import functools

import jax
import jax.numpy as jnp
from jax.experimental import pallas as pl
from jax.experimental.pallas import tpu as pltpu


def _round_up(x, m):
    return (x + m - 1) // m * m


def _choose_tk(K):
    """Pick a K tile that divides K exactly (avoids padding the im2col matrix)."""
    if K % 256 == 0:
        return 256
    if K % 128 == 0:
        return 128
    return K  # single K step; block equals the full K dim (allowed by Mosaic)


# ----------------------------- Pallas kernels -------------------------------

def _matmul_bn_kernel(*refs, relu, has_residual):
    """Tiled bf16 matmul, f32 accumulation, fused BN scale/bias (+residual, +ReLU)."""
    if has_residual:
        a_ref, b_ref, s_ref, z_ref, r_ref, o_ref, acc_ref = refs
    else:
        a_ref, b_ref, s_ref, z_ref, o_ref, acc_ref = refs
        r_ref = None
    k = pl.program_id(2)

    @pl.when(k == 0)
    def _():
        acc_ref[...] = jnp.zeros_like(acc_ref)

    acc_ref[...] += jnp.dot(a_ref[...], b_ref[...],
                            preferred_element_type=jnp.float32)

    @pl.when(k == pl.num_programs(2) - 1)
    def _():
        y = acc_ref[...] * s_ref[...] + z_ref[...]          # f32 epilogue
        if r_ref is not None:
            y = y + r_ref[...].astype(jnp.float32)          # fused residual add
        if relu:
            y = jnp.maximum(y, 0.0)
        o_ref[...] = y.astype(o_ref.dtype)


def matmul_bn(a, b, scale, shift, n_real, *, relu, residual=None,
              out_dtype=jnp.bfloat16):
    """act((a @ b) * scale + shift [+ residual]); scale/shift broadcast over rows.

    `b`, `scale`, `shift` are pre-padded to Np (multiple of 128) at param build time.
    """
    M, K = a.shape
    Kb, Np = b.shape
    assert Kb == K

    tm = min(512, _round_up(M, 8))
    Mp = _round_up(M, tm)
    tk = _choose_tk(K)
    tn = 256 if Np % 256 == 0 else 128
    if Mp // tm == 1 and Np // tn == 1 and Np >= 256:
        tn = 128            # give N >= 2 blocks so both v7x TensorCores get work

    if a.dtype != jnp.bfloat16:
        a = a.astype(jnp.bfloat16)
    if Mp != M:
        a = jnp.pad(a, ((0, Mp - M), (0, 0)))

    inputs = [a, b, scale, shift]
    in_specs = [
        pl.BlockSpec((tm, tk), lambda i, j, k: (i, k)),
        pl.BlockSpec((tk, tn), lambda i, j, k: (k, j)),
        pl.BlockSpec((1, tn), lambda i, j, k: (0, j)),
        pl.BlockSpec((1, tn), lambda i, j, k: (0, j)),
    ]
    has_residual = residual is not None
    if has_residual:
        r = residual if residual.dtype == jnp.bfloat16 else residual.astype(jnp.bfloat16)
        if Mp != M or Np != r.shape[1]:
            r = jnp.pad(r, ((0, Mp - M), (0, Np - r.shape[1])))
        inputs.append(r)
        in_specs.append(pl.BlockSpec((tm, tn), lambda i, j, k: (i, j)))

    out = pl.pallas_call(
        functools.partial(_matmul_bn_kernel, relu=relu, has_residual=has_residual),
        out_shape=jax.ShapeDtypeStruct((Mp, Np), out_dtype),
        grid_spec=pltpu.PrefetchScalarGridSpec(
            num_scalar_prefetch=0,
            grid=(Mp // tm, Np // tn, K // tk),
            in_specs=in_specs,
            out_specs=pl.BlockSpec((tm, tn), lambda i, j, k: (i, j)),
            scratch_shapes=[pltpu.VMEM((tm, tn), jnp.float32)],
        ),
        compiler_params=pltpu.CompilerParams(
            dimension_semantics=("parallel", "parallel", "arbitrary"),
            vmem_limit_bytes=32 * 1024 * 1024),
    )(*inputs)

    if Mp != M or Np != n_real:
        out = out[:M, :n_real]
    return out


def _gap_kernel(x_ref, o_ref):
    # (1, H*W, C) bf16 -> (1, 1, C) f32 mean
    o_ref[...] = jnp.mean(x_ref[...].astype(jnp.float32), axis=1, keepdims=True)


def global_avgpool(x):
    """Gridded global average pool: one image per grid step."""
    B, H, W, C = x.shape
    x2 = x.reshape(B, H * W, C)
    out = pl.pallas_call(
        _gap_kernel,
        out_shape=jax.ShapeDtypeStruct((B, 1, C), jnp.float32),
        grid_spec=pltpu.PrefetchScalarGridSpec(
            num_scalar_prefetch=0,
            grid=(B,),
            in_specs=[pl.BlockSpec((1, H * W, C), lambda b: (b, 0, 0))],
            out_specs=pl.BlockSpec((1, 1, C), lambda b: (b, 0, 0)),
        ),
        compiler_params=pltpu.CompilerParams(
            dimension_semantics=("parallel",),
            vmem_limit_bytes=32 * 1024 * 1024),
    )(x2)
    return out.reshape(B, C)


# ------------------------------ layer wrappers ------------------------------

def maxpool3x3_s2(x):
    """3x3 / stride 2 / pad 1 max-pool (PyTorch semantics, -inf padding).

    Pairwise jnp.maximum tree over strided slices of the padded input: no
    (9, M, C) stack is ever materialised (review-recommended form; XLA fuses it).
    """
    B, H, W, C = x.shape
    xp = jnp.pad(x, ((0, 0), (1, 1), (1, 1), (0, 0)),
                 constant_values=-jnp.inf)
    Ho = (H + 2 - 3) // 2 + 1
    Wo = (W + 2 - 3) // 2 + 1
    out = None
    for kh in range(3):
        for kw in range(3):
            tap = xp[:, kh:kh + 2 * Ho:2, kw:kw + 2 * Wo:2, :]
            out = tap if out is None else jnp.maximum(out, tap)
    return out


def conv2d_bn(x, layer, *, stride, padding, relu, residual=None,
              out_dtype=jnp.bfloat16):
    """x: (B,H,W,Cin) NHWC bf16.  (im2col for K>1) + fused Pallas matmul."""
    B, H, W, Cin = x.shape
    kh, kw = layer["ksize"]
    cout = layer["cout"]
    if kh == 1 and kw == 1:
        xs = x[:, ::stride, ::stride, :] if stride > 1 else x
        Ho, Wo = xs.shape[1], xs.shape[2]
        a = xs.reshape(B * Ho * Wo, Cin)
    else:
        xp = jnp.pad(x, ((0, 0), (padding, padding), (padding, padding), (0, 0)))
        Ho = (H + 2 * padding - kh) // stride + 1
        Wo = (W + 2 * padding - kw) // stride + 1
        taps = [xp[:, i:i + stride * Ho:stride, j:j + stride * Wo:stride, :]
                for i in range(kh) for j in range(kw)]
        a = jnp.concatenate(taps, axis=-1).reshape(B * Ho * Wo, kh * kw * Cin)
    res2d = None
    if residual is not None:
        res2d = residual.reshape(-1, residual.shape[-1])
    y = matmul_bn(a, layer["w"], layer["scale"], layer["shift"], cout,
                  relu=relu, residual=res2d, out_dtype=out_dtype)
    return y.reshape(B, Ho, Wo, cout)


# --------------------------- parameter construction -------------------------

class _KeyGen:
    def __init__(self, seed):
        self._key = jax.random.PRNGKey(seed)

    def __call__(self):
        self._key, sub = jax.random.split(self._key)
        return sub


def _make_conv_bn(kg, kh, kw, cin, cout):
    w = jax.random.normal(kg(), (kh, kw, cin, cout), jnp.float32)
    w = w * (2.0 / (kh * kw * cin)) ** 0.5
    gamma = 1.0 + 0.1 * jax.random.normal(kg(), (cout,), jnp.float32)
    beta = 0.1 * jax.random.normal(kg(), (cout,), jnp.float32)
    mean = 0.1 * jax.random.normal(kg(), (cout,), jnp.float32)
    var = 1.0 + 0.1 * jax.random.uniform(kg(), (cout,), jnp.float32)
    scale = gamma * jax.lax.rsqrt(var + 1e-5)            # folded inference BN
    shift = beta - mean * scale
    K = kh * kw * cin
    Np = _round_up(cout, 128)
    pad_n = Np - cout
    # Pre-reshape / pre-pad / pre-cast ONCE here (not every forward call).
    w2 = jnp.pad(w.reshape(K, cout), ((0, 0), (0, pad_n))).astype(jnp.bfloat16)
    scale_p = jnp.pad(scale.reshape(1, cout), ((0, 0), (0, pad_n)))
    shift_p = jnp.pad(shift.reshape(1, cout), ((0, 0), (0, pad_n)))
    return {"w": w2, "scale": scale_p, "shift": shift_p,
            "ksize": (kh, kw), "cout": cout}


def _make_bottleneck(kg, inplanes, planes, stride):
    p = {
        "conv1": _make_conv_bn(kg, 1, 1, inplanes, planes),
        "conv2": _make_conv_bn(kg, 3, 3, planes, planes),
        "conv3": _make_conv_bn(kg, 1, 1, planes, planes * 4),
        "stride": stride,
    }
    if stride != 1 or inplanes != planes * 4:
        p["downsample"] = _make_conv_bn(kg, 1, 1, inplanes, planes * 4)
    return p


def make_waste_classifier_params(num_classes, seed=0):
    kg = _KeyGen(seed)
    params = {"conv1": _make_conv_bn(kg, 7, 7, 3, 64)}
    layers_cfg = [(64, 3, 1), (128, 4, 2), (256, 6, 2), (512, 3, 2)]  # ResNet-50
    inplanes, layers = 64, []
    for planes, nblocks, stride in layers_cfg:
        blocks = []
        for bi in range(nblocks):
            blocks.append(_make_bottleneck(kg, inplanes, planes,
                                           stride if bi == 0 else 1))
            inplanes = planes * 4
        layers.append(blocks)
    params["layers"] = layers

    Np = _round_up(num_classes, 128)
    fc_w = jax.random.normal(kg(), (2048, num_classes), jnp.float32)
    fc_w = fc_w * (1.0 / 2048) ** 0.5
    params["fc"] = {
        "w": jnp.pad(fc_w, ((0, 0), (0, Np - num_classes))).astype(jnp.bfloat16),
        "scale": jnp.ones((1, Np), jnp.float32),
        "shift": jnp.zeros((1, Np), jnp.float32),
        "ksize": (1, 1),
        "cout": num_classes,
    }
    return params


# -------------------------------- forward -----------------------------------

def _bottleneck_forward(x, p):
    out = conv2d_bn(x, p["conv1"], stride=1, padding=0, relu=True)
    out = conv2d_bn(out, p["conv2"], stride=p["stride"], padding=1, relu=True)
    if "downsample" in p:
        identity = conv2d_bn(x, p["downsample"], stride=p["stride"], padding=0,
                             relu=False)
    else:
        identity = x
    # residual add + ReLU fused into the conv3 matmul epilogue
    out = conv2d_bn(out, p["conv3"], stride=1, padding=0, relu=True,
                    residual=identity)
    return out


def waste_classifier_forward(x_nchw, params):
    """Equivalent of WasteClassifier.forward: ResNet-50 with a new fc head."""
    x = jnp.transpose(x_nchw, (0, 2, 3, 1)).astype(jnp.bfloat16)  # NCHW -> NHWC bf16
    x = conv2d_bn(x, params["conv1"], stride=2, padding=3, relu=True)
    x = maxpool3x3_s2(x)
    for blocks in params["layers"]:
        for blk in blocks:
            x = _bottleneck_forward(x, blk)
    pooled = global_avgpool(x)                                    # (B, 2048) f32
    fc = params["fc"]
    logits = matmul_bn(pooled, fc["w"], fc["scale"], fc["shift"], fc["cout"],
                       relu=False, out_dtype=jnp.float32)
    return logits


def waste_classifier_predict(x_nchw, params, idx_to_class):
    logits = waste_classifier_forward(x_nchw, params)
    preds = jnp.argmax(logits, axis=1)
    return [idx_to_class[str(int(i))] for i in preds]


# --------------------------------- main --------------------------------------

if __name__ == "__main__":
    num_classes = 6
    # TODO(synk): models/class_indices.json is not read; synthetic class names.
    idx_to_class = {str(i): n for i, n in enumerate(
        ["cardboard", "glass", "metal", "paper", "plastic", "trash"])}

    params = make_waste_classifier_params(num_classes, seed=0)

    key = jax.random.PRNGKey(0)
    x = jax.random.normal(key, (2, 3, 64, 64), jnp.float32)   # small NCHW input

    logits = waste_classifier_forward(x, params)
    logits = jax.block_until_ready(logits)

    assert logits.shape == (2, num_classes)
    assert bool(jnp.all(jnp.isfinite(logits)))
    _ = waste_classifier_predict(x, params, idx_to_class)
    print("KERNEL_OK")
</pallas_src>

<mosaic_0001>
module attributes {stable_mosaic.version = 11 : i64} {
  func.func @_matmul_bn_kernel(%arg0: i32, %arg1: i32, %arg2: i32, %arg3: memref<512x147xbf16, #tpu.memory_space<vmem>>, %arg4: memref<147x128xbf16, #tpu.memory_space<vmem>>, %arg5: memref<1x128xf32, #tpu.memory_space<vmem>>, %arg6: memref<1x128xf32, #tpu.memory_space<vmem>>, %arg7: memref<512x128xbf16, #tpu.memory_space<vmem>>, %arg8: memref<512x128xf32, #tpu.memory_space<vmem>>) attributes {dimension_semantics = [#tpu.dimension_semantics<parallel>, #tpu.dimension_semantics<parallel>, #tpu.dimension_semantics<arbitrary>], iteration_bounds = array<i64: 4, 1, 1>, scalar_prefetch = 0 : i64, scratch_operands = 1 : i64, tpu.core_type = #tpu.core_type<tc>, window_params = [{transform_indices = @transform_0, window_bounds = array<i64: 512, 147>}, {transform_indices = @transform_1, window_bounds = array<i64: 147, 128>}, {transform_indices = @transform_2, window_bounds = array<i64: 1, 128>}, {transform_indices = @transform_3, window_bounds = array<i64: 1, 128>}, {transform_indices = @transform_4, window_bounds = array<i64: 512, 128>}]} {
    %c0_i32 = arith.constant 0 : i32
    %0 = arith.cmpi eq, %arg2, %c0_i32 : i32
    %1 = arith.extui %0 : i1 to i32
    %c0_i32_0 = arith.constant 0 : i32
    %2 = arith.cmpi ne, %1, %c0_i32_0 : i32
    scf.if %2 {
      %cst_10 = arith.constant 0.000000e+00 : f32
      %12 = vector.broadcast %cst_10 : f32 to vector<512x128xf32>
      %c0_11 = arith.constant 0 : index
      %c0_12 = arith.constant 0 : index
      %13 = vector.load %arg8[%c0_11, %c0_12] : memref<512x128xf32, #tpu.memory_space<vmem>>, vector<512x128xf32>
      tpu.vector_store %arg8[%c0_11, %c0_12], %12 {strides = array<i32>} : memref<512x128xf32, #tpu.memory_space<vmem>>, vector<512x128xf32>,
    } else {
    }
    %c0 = arith.constant 0 : index
    %c0_1 = arith.constant 0 : index
    %3 = vector.load %arg8[%c0, %c0_1] : memref<512x128xf32, #tpu.memory_space<vmem>>, vector<512x128xf32>
    %c0_2 = arith.constant 0 : index
    %c0_3 = arith.constant 0 : index
    %4 = vector.load %arg3[%c0_2, %c0_3] : memref<512x147xbf16, #tpu.memory_space<vmem>>, vector<512x147xbf16>
    %c0_4 = arith.constant 0 : index
    %c0_5 = arith.constant 0 : index
    %5 = vector.load %arg4[%c0_4, %c0_5] : memref<147x128xbf16, #tpu.memory_space<vmem>>, vector<147x128xbf16>
    %cst = arith.constant dense<0.000000e+00> : vector<512x128xf32>
    %6 = tpu.matmul %4, %5, %cst {dimension_numbers = #tpu.dot_dimension_numbers<[1], [0], [0], [1], [0, 0, 1, 1], [], []>} : vector<512x147xbf16>, vector<147x128xbf16>, vector<512x128xf32> -> vector<512x128xf32>
    %7 = arith.addf %3, %6 : vector<512x128xf32>
    %c0_6 = arith.constant 0 : index
    %c0_7 = arith.constant 0 : index
    %8 = vector.load %arg8[%c0_6, %c0_7] : memref<512x128xf32, #tpu.memory_space<vmem>>, vector<512x128xf32>
    tpu.vector_store %arg8[%c0_6, %c0_7], %7 {strides = array<i32>} : memref<512x128xf32, #tpu.memory_space<vmem>>, vector<512x128xf32>,
    %c0_i32_8 = arith.constant 0 : i32
    %9 = arith.cmpi eq, %arg2, %c0_i32_8 : i32
    %10 = arith.extui %9 : i1 to i32
    %c0_i32_9 = arith.constant 0 : i32
    %11 = arith.cmpi ne, %10, %c0_i32_9 : i32
    scf.if %11 {
      %c0_10 = arith.constant 0 : index
      %c0_11 = arith.constant 0 : index
      %12 = vector.load %arg8[%c0_10, %c0_11] : memref<512x128xf32, #tpu.memory_space<vmem>>, vector<512x128xf32>
      %c0_12 = arith.constant 0 : index
      %c0_13 = arith.constant 0 : index
      %13 = vector.load %arg5[%c0_12, %c0_13] : memref<1x128xf32, #tpu.memory_space<vmem>>, vector<1x128xf32>
      %14 = vector.broadcast %13 : vector<1x128xf32> to vector<512x128xf32>
      %15 = arith.mulf %12, %14 : vector<512x128xf32>
      %c0_14 = arith.constant 0 : index
      %c0_15 = arith.constant 0 : index
      %16 = vector.load %arg6[%c0_14, %c0_15] : memref<1x128xf32, #tpu.memory_space<vmem>>, vector<1x128xf32>
      %17 = vector.broadcast %16 : vector<1x128xf32> to vector<512x128xf32>
      %18 = arith.addf %15, %17 : vector<512x128xf32>
      %cst_16 = arith.constant 0.000000e+00 : f32
      %19 = vector.broadcast %cst_16 : f32 to vector<512x128xf32>
      %20 = arith.maximumf %18, %19 : vector<512x128xf32>
      %21 = arith.truncf %20 : vector<512x128xf32> to vector<512x128xbf16>
      %c0_17 = arith.constant 0 : index
      %c0_18 = arith.constant 0 : index
      %22 = vector.load %arg7[%c0_17, %c0_18] : memref<512x128xbf16, #tpu.memory_space<vmem>>, vector<512x128xbf16>
      tpu.vector_store %arg7[%c0_17, %c0_18], %21 {strides = array<i32>} : memref<512x128xbf16, #tpu.memory_space<vmem>>, vector<512x128xbf16>,
    } else {
    }
    return
  }
  func.func @transform_0(%arg0: i32, %arg1: i32, %arg2: i32) -> (i32, i32) {
    %c0_i32 = arith.constant 0 : i32
    return %arg0, %arg2 : i32, i32
  }
  func.func @transform_1(%arg0: i32, %arg1: i32, %arg2: i32) -> (i32, i32) {
    %c0_i32 = arith.constant 0 : i32
    return %arg2, %arg1 : i32, i32
  }
  func.func @transform_2(%arg0: i32, %arg1: i32, %arg2: i32) -> (i32, i32) {
    %c0_i32 = arith.constant 0 : i32
    %c0_i32_0 = arith.constant 0 : i32
    return %c0_i32, %arg1 : i32, i32
  }
  func.func @transform_3(%arg0: i32, %arg1: i32, %arg2: i32) -> (i32, i32) {
    %c0_i32 = arith.constant 0 : i32
    %c0_i32_0 = arith.constant 0 : i32
    return %c0_i32, %arg1 : i32, i32
  }
  func.func @transform_4(%arg0: i32, %arg1: i32, %arg2: i32) -> (i32, i32) {
    %c0_i32 = arith.constant 0 : i32
    return %arg0, %arg1 : i32, i32
  }
}

</mosaic_0001>

<llo_original>
// kernel: tpu_custom_call.1
$region0: #{tpu_custom_call.1}
  #allocation0 [shape = 'u32[]', space=smem, size = 0x4, offset = 0x4, fixed_abs, tag = 'smem constant byte address 0x4 - core index']
  #allocation1 [shape = 'u32[144,128]{1,0:T(1,128)}', space=vmem, size = 0x12000, scoped, tag = 'internal scratch']
  #allocation2 [shape = 'f32[512,128]{1,0:T(8,128)}', space=vmem, size = 0x40000, scoped, tag = 'scratch operand']
  %s0 = inlined_call_operand.vmem [shape: bf16[2048,147], index: 0, kind: input, shape index: {}]
  %s1 = inlined_call_operand.vmem [shape: bf16[147,128], index: 1, kind: input, shape index: {}]
  %s2 = inlined_call_operand.vmem [shape: f32[1,128], index: 2, kind: input, shape index: {}]
  %s3 = inlined_call_operand.vmem [shape: f32[1,128], index: 3, kind: input, shape index: {}]
  %s4 = inlined_call_operand.hbm [shape: bf16[2048,128], index: 4, kind: output, shape index: {}]
  %s5 = sld [smem:[#allocation0]]
  $region57: #{tpu_custom_call.1} parent=0
    _
  %s7 = ssub.s32 1, %s5
  %s8 = scalar_select 0, %s7, %s5
  $region1: #{tpu_custom_call.1} parent=0
    #allocation3 [shape = 'u8[262144]{0}', space=vmem, size = 0x40000, scoped, tag = 'output window, operand 0']
    #allocation4 [shape = 's32[2]{0}', space=sflag, size = 0x8, scoped, tag = 'scoped memory for tpu_custom_call.1']
    %9 = vsyncpa [#allocation4], 0
    %s10 = scalar_lea.sflag [#allocation4], 1
    %11 = vsyncpa %s10, 0
    loop: start=0, step=1, limit=6
    $region2: #{tpu_custom_call.1} parent=1 // loop_pre_header
      _
    $region3: #{tpu_custom_call.1} parent=1 // loop_header
      %s13 = sphi 0, %s17
      %p14 = scmp.ge.s32.totalorder %s13, 6
      %s20 = sphi 0, %s39
      %s21 = sphi 0, %s35
      %s22 = sphi 0, %s31
      %s23 = sphi 0, %s20
      %s24 = sphi 0, %s21
      %s25 = sphi 0, %s22
      %s26 = sphi 0, %s23
      %s27 = sphi 0, %s24
      %s28 = sphi 0, %s25
      %s44 = sphi 0, %s46
      %s47 = sphi 0, %s44
      %s48 = sphi 0, %s47
      %s64 = sphi 0, %s48
      %s72 = sphi 0, %s74
      %s75 = sphi 0, %s72
      %s76 = sphi 0, %s75
      %s92 = sphi 0, %s76
      %s98 = sphi 0, %s100
      %s101 = sphi 0, %s98
      %s102 = sphi 0, %s101
      %s118 = sphi 0, %s102
      %s124 = sphi 0, %s126
      %s127 = sphi 0, %s124
      %s128 = sphi 0, %s127
      %s144 = sphi 0, %s128
      %s152 = sphi 0, %s154
      %s155 = sphi 0, %s152
      %s156 = sphi 0, %s155
      %s172 = sphi 0, %s156
    $region4: #{tpu_custom_call.1} parent=1 // loop_header_branch
      %16 = sbr.rel (%p14) target = $region8
    $region5: #{tpu_custom_call.1} parent=1 // loop_body
      %s18 = ssub.s32 %s13, 1
      %s19 = ssub.s32 %s13, 2
      %s29 = sadd.s32 1, %s22
      %p30 = scmp.ge.s32.totalorder %s29, 1
      %s31 = scalar_select %p30, 0, %s29
      %s32 = sadd.s32 1, %s21
      %s33 = scalar_select %p30, %s32, %s21
      %p34 = scmp.ge.s32.totalorder %s33, 1
      %s35 = scalar_select %p34, 0, %s33
      %s36 = sadd.s32 1, %s20
      %s37 = scalar_select %p34, %s36, %s20
      %p38 = scmp.ge.s32.totalorder %s37, 4
      %s39 = scalar_select %p38, 0, %s37
      %s40 = ssub.s32 %s20, %s39
      %s41 = ssub.s32 %s22, %s31
      %s42 = sor.u32 %s40, %s41
      %p43 = scmp.eq.s32.totalorder %s42, 0
      %s45 = sadd.s32 %s44, 1
      %s46 = scalar_select %p43, %s44, %s45
      %p49 = pneg %p43
      %p50 = scmp.eq.s32.totalorder %s13, 3
      %p51 = por %p49, %p50
      %p52 = scmp.ne.s32.totalorder %s44, %s47
      %p53 = scmp.eq.s32.totalorder %s13, 0
      %p54 = por %p52, %p53
      %p55 = scmp.ne.s32.totalorder %s44, %s47
      %p56 = scmp.eq.s32.totalorder %s18, 3
      %p57 = por %p55, %p56
      %p58 = scmp.ne.s32.totalorder %s47, %s48
      %p59 = scmp.eq.s32.totalorder %s18, 0
      %p60 = por %p58, %p59
      %p61 = scmp.ne.s32.totalorder %s47, %s48
      %p62 = scmp.eq.s32.totalorder %s19, 3
      %p63 = por %p61, %p62
      %p65 = scmp.ne.s32.totalorder %s48, %s64
      %p66 = scmp.eq.s32.totalorder %s19, 0
      %p67 = por %p65, %p66
      %s68 = ssub.s32 %s22, %s31
      %s69 = ssub.s32 %s21, %s35
      %s70 = sor.u32 %s68, %s69
      %p71 = scmp.eq.s32.totalorder %s70, 0
      %s73 = sadd.s32 %s72, 1
      %s74 = scalar_select %p71, %s72, %s73
      %p77 = pneg %p71
      %p78 = scmp.eq.s32.totalorder %s13, 3
      %p79 = por %p77, %p78
      %p80 = scmp.ne.s32.totalorder %s72, %s75
      %p81 = scmp.eq.s32.totalorder %s13, 0
      %p82 = por %p80, %p81
      %p83 = scmp.ne.s32.totalorder %s72, %s75
      %p84 = scmp.eq.s32.totalorder %s18, 3
      %p85 = por %p83, %p84
      %p86 = scmp.ne.s32.totalorder %s75, %s76
      %p87 = scmp.eq.s32.totalorder %s18, 0
      %p88 = por %p86, %p87
      %p89 = scmp.ne.s32.totalorder %s75, %s76
      %p90 = scmp.eq.s32.totalorder %s19, 3
      %p91 = por %p89, %p90
      %p93 = scmp.ne.s32.totalorder %s76, %s92
      %p94 = scmp.eq.s32.totalorder %s19, 0
      %p95 = por %p93, %p94
      %s96 = ssub.s32 %s21, %s35
      %p97 = scmp.eq.s32.totalorder %s96, 0
      %s99 = sadd.s32 %s98, 1
      %s100 = scalar_select %p97, %s98, %s99
      %p103 = pneg %p97
      %p104 = scmp.eq.s32.totalorder %s13, 3
      %p105 = por %p103, %p104
      %p106 = scmp.ne.s32.totalorder %s98, %s101
      %p107 = scmp.eq.s32.totalorder %s13, 0
      %p108 = por %p106, %p107
      %p109 = scmp.ne.s32.totalorder %s98, %s101
      %p110 = scmp.eq.s32.totalorder %s18, 3
      %p111 = por %p109, %p110
      %p112 = scmp.ne.s32.totalorder %s101, %s102
      %p113 = scmp.eq.s32.totalorder %s18, 0
      %p114 = por %p112, %p113
      %p115 = scmp.ne.s32.totalorder %s101, %s102
      %p116 = scmp.eq.s32.totalorder %s19, 3
      %p117 = por %p115, %p116
      %p119 = scmp.ne.s32.totalorder %s102, %s118
      %p120 = scmp.eq.s32.totalorder %s19, 0
      %p121 = por %p119, %p120
      %s122 = ssub.s32 %s21, %s35
      %p123 = scmp.eq.s32.totalorder %s122, 0
      %s125 = sadd.s32 %s124, 1
      %s126 = scalar_select %p123, %s124, %s125
      %p129 = pneg %p123
      %p130 = scmp.eq.s32.totalorder %s13, 3
      %p131 = por %p129, %p130
      %p132 = scmp.ne.s32.totalorder %s124, %s127
      %p133 = scmp.eq.s32.totalorder %s13, 0
      %p134 = por %p132, %p133
      %p135 = scmp.ne.s32.totalorder %s124, %s127
      %p136 = scmp.eq.s32.totalorder %s18, 3
      %p137 = por %p135, %p136
      %p138 = scmp.ne.s32.totalorder %s127, %s128
      %p139 = scmp.eq.s32.totalorder %s18, 0
      %p140 = por %p138, %p139
      %p141 = scmp.ne.s32.totalorder %s127, %s128
      %p142 = scmp.eq.s32.totalorder %s19, 3
      %p143 = por %p141, %p142
      %p145 = scmp.ne.s32.totalorder %s128, %s144
      %p146 = scmp.eq.s32.totalorder %s19, 0
      %p147 = por %p145, %p146
      %s148 = ssub.s32 %s20, %s39
      %s149 = ssub.s32 %s21, %s35
      %s150 = sor.u32 %s148, %s149
      %p151 = scmp.eq.s32.totalorder %s150, 0
      %s153 = sadd.s32 %s152, 1
      %s154 = scalar_select %p151, %s152, %s153
      %p157 = pneg %p151
      %p158 = scmp.eq.s32.totalorder %s13, 3
      %p159 = por %p157, %p158
      %p160 = scmp.ne.s32.totalorder %s152, %s155
      %p161 = scmp.eq.s32.totalorder %s13, 0
      %p162 = por %p160, %p161
      %p163 = scmp.ne.s32.totalorder %s152, %s155
      %p164 = scmp.eq.s32.totalorder %s18, 3
      %p165 = por %p163, %p164
      %p166 = scmp.ne.s32.totalorder %s155, %s156
      %p167 = scmp.eq.s32.totalorder %s18, 0
      %p168 = por %p166, %p167
      %p169 = scmp.ne.s32.totalorder %s155, %s156
      %p170 = scmp.eq.s32.totalorder %s19, 3
      %p171 = por %p169, %p170
      %p173 = scmp.ne.s32.totalorder %s156, %s172
      %p174 = scmp.eq.s32.totalorder %s19, 0
      %p175 = por %p173, %p174
      %p176 = scmp.le.s32.totalorder 1, %s13
      %p177 = scmp.lt.s32.totalorder %s13, 5
      %p178 = pnand %p176, %p177
      %p179 = pneg %p178
      // Predicated region
      $region9: #{tpu_custom_call.1} parent=5 // pred_check
        _
      $region10: #{tpu_custom_call.1} parent=5 // pred_check_branch
        %181 = sbr.rel (%p178) target = $region12
      $region11: #{tpu_custom_call.1} parent=5 // pred_region
        %s182 = ssub.s32 %s13, 1
        // Predicated region
        $region13: #{tpu_custom_call.1} parent=11 // pred_check
          %p183 = pneg %p88
        $region14: #{tpu_custom_call.1} parent=11 // pred_check_branch
          %185 = sbr.rel (%p183) target = $region16
        $region15: #{tpu_custom_call.1} parent=11 // pred_region
          %s186 = smul.u32 19, %s25
          %p187 = scmp.lt.s32.totalorder %s186, 18
          %s188 = scalar_select %p187, %s186, 18
          %p189 = scmp.lt.s32.totalorder %s24, 0
          %s190 = scalar_select %p189, %s24, 0
          %s191 = sadd.s32 %s190, %s188
          %s192 = smul.addr %s191, 4
          %s193 = scalar_lea.vmem %s1, %s192
          %s194 = smul.u32 19, %s25
        $region16: #{tpu_custom_call.1} parent=11 // pred_fallthru
          _
        // Predicated region
        $region17: #{tpu_custom_call.1} parent=11 // pred_check
          %p195 = pneg %p114
        $region18: #{tpu_custom_call.1} parent=11 // pred_check_branch
          %197 = sbr.rel (%p195) target = $region20
        $region19: #{tpu_custom_call.1} parent=11 // pred_region
          %p198 = scmp.lt.s32.totalorder %s24, 0
          %s199 = scalar_select %p198, %s24, 0
          %s200 = scalar_lea.vmem %s2, %s199
        $region20: #{tpu_custom_call.1} parent=11 // pred_fallthru
          _
        // Predicated region
        $region21: #{tpu_custom_call.1} parent=11 // pred_check
          %p201 = pneg %p140
        $region22: #{tpu_custom_call.1} parent=11 // pred_check_branch
          %203 = sbr.rel (%p201) target = $region24
        $region23: #{tpu_custom_call.1} parent=11 // pred_region
          %p204 = scmp.lt.s32.totalorder %s24, 0
          %s205 = scalar_select %p204, %s24, 0
          %s206 = scalar_lea.vmem %s3, %s205
        $region24: #{tpu_custom_call.1} parent=11 // pred_fallthru
          _
      $region12: #{tpu_custom_call.1} parent=5 // pred_fallthru
        _
      %p207 = scmp.lt.s32.totalorder %s13, 4
      // Predicated region
      $region25: #{tpu_custom_call.1} parent=5 // pred_check
        %p208 = pneg %p207
      $region26: #{tpu_custom_call.1} parent=5 // pred_check_branch
        %210 = sbr.rel (%p208) target = $region28
      $region27: #{tpu_custom_call.1} parent=5 // pred_region
        // Predicated region
        $region29: #{tpu_custom_call.1} parent=27 // pred_check
          %p211 = pneg %p54
        $region30: #{tpu_custom_call.1} parent=27 // pred_check_branch
          %213 = sbr.rel (%p211) target = $region32
        $region31: #{tpu_custom_call.1} parent=27 // pred_region
          %s214 = smul.u32 64, %s20
          %s215 = smul.u32 2, %s22
          %p216 = scmp.lt.s32.totalorder %s214, 255
          %s217 = scalar_select %p216, %s214, 255
          %p218 = scmp.lt.s32.totalorder %s215, 1
          %s219 = scalar_select %p218, %s215, 1
          %s220 = smul.addr %s217, 2
          %s221 = sadd.s32 %s219, %s220
          %s222 = smul.addr %s221, 4
          %s223 = scalar_lea.vmem %s0, %s222
          %s224 = smul.u32 64, %s20
          %s225 = smul.u32 2, %s22
        $region32: #{tpu_custom_call.1} parent=27 // pred_fallthru
          _
      $region28: #{tpu_custom_call.1} parent=5 // pred_fallthru
        _
      %p226 = scmp.le.s32.totalorder 1, %s13
      %p227 = scmp.lt.s32.totalorder %s13, 5
      %p228 = pnand %p226, %p227
      %p229 = pneg %p228
      // Predicated region
      $region33: #{tpu_custom_call.1} parent=5 // pred_check
        _
      $region34: #{tpu_custom_call.1} parent=5 // pred_check_branch
        %231 = sbr.rel (%p228) target = $region36
      $region35: #{tpu_custom_call.1} parent=5 // pred_region
        %s232 = ssub.s32 %s13, 1
        %s233 = smul.u32 64, %s23
        %s234 = smul.u32 2, %s25
        %p235 = scmp.lt.s32.totalorder %s233, 255
        %s236 = scalar_select %p235, %s233, 255
        %p237 = scmp.lt.s32.totalorder %s234, 1
        %s238 = scalar_select %p237, %s234, 1
        %s239 = smul.addr %s236, 2
        %s240 = sadd.s32 %s238, %s239
        %s241 = smul.addr %s240, 4
        %s242 = scalar_lea.vmem %s0, %s241
        %p243 = pneg %p60
        %p244 = pneg %p57
        %s245 = smul.u32 19, %s25
        %p246 = scmp.lt.s32.totalorder %s245, 18
        %s247 = scalar_select %p246, %s245, 18
        %p248 = scmp.lt.s32.totalorder %s24, 0
        %s249 = scalar_select %p248, %s24, 0
        %s250 = sadd.s32 %s249, %s247
        %s251 = smul.addr %s250, 4
        %s252 = scalar_lea.vmem %s1, %s251
        %p253 = pneg %p88
        %p254 = pneg %p85
        %p255 = scmp.lt.s32.totalorder %s24, 0
        %s256 = scalar_select %p255, %s24, 0
        %s257 = scalar_lea.vmem %s2, %s256
        %p258 = pneg %p114
        %p259 = pneg %p111
        %p260 = scmp.lt.s32.totalorder %s24, 0
        %s261 = scalar_select %p260, %s24, 0
        %s262 = scalar_lea.vmem %s3, %s261
        %p263 = pneg %p140
        %p264 = pneg %p137
        %p265 = pneg %p168
        %p266 = pneg %p165
        %s267 = sand.u32 %s155, 1
        %s268 = scalar_lea.sflag [#allocation4], %s267
        %s269 = sand.u32 %s155, 1
        %s270 = smul.addr %s269, 256
        %s271 = scalar_lea.vmem [#allocation3], %s270
        %s272 = smul.u32 64, %s23
        %s273 = smul.u32 2, %s25
        %p274 = scmp.lt.s32.totalorder %s272, 255
        %s275 = scalar_select %p274, %s272, 255
        %p276 = scmp.lt.s32.totalorder %s273, 1
        %s277 = scalar_select %p276, %s273, 1
        %s278 = smul.addr %s275, 2
        %s279 = sadd.s32 %s277, %s278
        %s280 = smul.addr %s279, 4
        %s281 = scalar_lea.vmem %s0, %s280
        %s282 = smul.u32 64, %s23
        %s283 = smul.u32 2, %s25
        %s284 = smul.u32 19, %s25
        %p285 = scmp.lt.s32.totalorder %s284, 18
        %s286 = scalar_select %p285, %s284, 18
        %p287 = scmp.lt.s32.totalorder %s24, 0
        %s288 = scalar_select %p287, %s24, 0
        %s289 = sadd.s32 %s288, %s286
        %s290 = smul.addr %s289, 4
        %s291 = scalar_lea.vmem %s1, %s290
        %s292 = smul.u32 19, %s25
        %p293 = scmp.lt.s32.totalorder %s24, 0
        %s294 = scalar_select %p293, %s24, 0
        %s295 = scalar_lea.vmem %s2, %s294
        %p296 = scmp.lt.s32.totalorder %s24, 0
        %s297 = scalar_select %p296, %s24, 0
        %s298 = scalar_lea.vmem %s3, %s297
        %s299 = smul.u32 64, %s23
        %p301 = scmp.eq.s32.totalorder %s25, 0
        // Predicated region
        $region37: #{tpu_custom_call.1} parent=35 // pred_check
          %p302 = pneg %p301
        $region38: #{tpu_custom_call.1} parent=35 // pred_check_branch
          %304 = sbr.rel (%p302) target = $region40
        $region39: #{tpu_custom_call.1} parent=35 // pred_region
          %305 = vst [vmem:[#allocation2] sm:$0xff] 0.0
          %306 = vst [vmem:[#allocation2 + $0x8] sm:$0xff] 0.0
          %307 = vst [vmem:[#allocation2 + $0x10] sm:$0xff] 0.0
          %308 = vst [vmem:[#allocation2 + $0x18] sm:$0xff] 0.0
          %309 = vst [vmem:[#allocation2 + $0x20] sm:$0xff] 0.0
          %310 = vst [vmem:[#allocation2 + $0x28] sm:$0xff] 0.0
          %311 = vst [vmem:[#allocation2 + $0x30] sm:$0xff] 0.0
          %312 = vst [vmem:[#allocation2 + $0x38] sm:$0xff] 0.0
          %313 = vst [vmem:[#allocation2 + $0x40] sm:$0xff] 0.0
          %314 = vst [vmem:[#allocation2 + $0x48] sm:$0xff] 0.0
          %315 = vst [vmem:[#allocation2 + $0x50] sm:$0xff] 0.0
          %316 = vst [vmem:[#allocation2 + $0x58] sm:$0xff] 0.0
          %317 = vst [vmem:[#allocation2 + $0x60] sm:$0xff] 0.0
          %318 = vst [vmem:[#allocation2 + $0x68] sm:$0xff] 0.0
          %319 = vst [vmem:[#allocation2 + $0x70] sm:$0xff] 0.0
          %320 = vst [vmem:[#allocation2 + $0x78] sm:$0xff] 0.0
          %321 = vst [vmem:[#allocation2 + $0x80] sm:$0xff] 0.0
          %322 = vst [vmem:[#allocation2 + $0x88] sm:$0xff] 0.0
          %323 = vst [vmem:[#allocation2 + $0x90] sm:$0xff] 0.0
          %324 = vst [vmem:[#allocation2 + $0x98] sm:$0xff] 0.0
          %325 = vst [vmem:[#allocation2 + $0xa0] sm:$0xff] 0.0
          %326 = vst [vmem:[#allocation2 + $0xa8] sm:$0xff] 0.0
          %327 = vst [vmem:[#allocation2 + $0xb0] sm:$0xff] 0.0
          %328 = vst [vmem:[#allocation2 + $0xb8] sm:$0xff] 0.0
          %329 = vst [vmem:[#allocation2 + $0xc0] sm:$0xff] 0.0
          %330 = vst [vmem:[#allocation2 + $0xc8] sm:$0xff] 0.0
          %331 = vst [vmem:[#allocation2 + $0xd0] sm:$0xff] 0.0
          %332 = vst [vmem:[#allocation2 + $0xd8] sm:$0xff] 0.0
          %333 = vst [vmem:[#allocation2 + $0xe0] sm:$0xff] 0.0
          %334 = vst [vmem:[#allocation2 + $0xe8] sm:$0xff] 0.0
          %335 = vst [vmem:[#allocation2 + $0xf0] sm:$0xff] 0.0
          %336 = vst [vmem:[#allocation2 + $0xf8] sm:$0xff] 0.0
          %337 = vst [vmem:[#allocation2 + $0x100] sm:$0xff] 0.0
          %338 = vst [vmem:[#allocation2 + $0x108] sm:$0xff] 0.0
          %339 = vst [vmem:[#allocation2 + $0x110] sm:$0xff] 0.0
          %340 = vst [vmem:[#allocation2 + $0x118] sm:$0xff] 0.0
          %341 = vst [vmem:[#allocation2 + $0x120] sm:$0xff] 0.0
          %342 = vst [vmem:[#allocation2 + $0x128] sm:$0xff] 0.0
          %343 = vst [vmem:[#allocation2 + $0x130] sm:$0xff] 0.0
          %344 = vst [vmem:[#allocation2 + $0x138] sm:$0xff] 0.0
          %345 = vst [vmem:[#allocation2 + $0x140] sm:$0xff] 0.0
          %346 = vst [vmem:[#allocation2 + $0x148] sm:$0xff] 0.0
          %347 = vst [vmem:[#allocation2 + $0x150] sm:$0xff] 0.0
          %348 = vst [vmem:[#allocation2 + $0x158] sm:$0xff] 0.0
          %349 = vst [vmem:[#allocation2 + $0x160] sm:$0xff] 0.0
          %350 = vst [vmem:[#allocation2 + $0x168] sm:$0xff] 0.0
          %351 = vst [vmem:[#allocation2 + $0x170] sm:$0xff] 0.0
          %352 = vst [vmem:[#allocation2 + $0x178] sm:$0xff] 0.0
          %353 = vst [vmem:[#allocation2 + $0x180] sm:$0xff] 0.0
          %354 = vst [vmem:[#allocation2 + $0x188] sm:$0xff] 0.0
          %355 = vst [vmem:[#allocation2 + $0x190] sm:$0xff] 0.0
          %356 = vst [vmem:[#allocation2 + $0x198] sm:$0xff] 0.0
          %357 = vst [vmem:[#allocation2 + $0x1a0] sm:$0xff] 0.0
          %358 = vst [vmem:[#allocation2 + $0x1a8] sm:$0xff] 0.0
          %359 = vst [vmem:[#allocation2 + $0x1b0] sm:$0xff] 0.0
          %360 = vst [vmem:[#allocation2 + $0x1b8] sm:$0xff] 0.0
          %361 = vst [vmem:[#allocation2 + $0x1c0] sm:$0xff] 0.0
          %362 = vst [vmem:[#allocation2 + $0x1c8] sm:$0xff] 0.0
          %363 = vst [vmem:[#allocation2 + $0x1d0] sm:$0xff] 0.0
          %364 = vst [vmem:[#allocation2 + $0x1d8] sm:$0xff] 0.0
          %365 = vst [vmem:[#allocation2 + $0x1e0] sm:$0xff] 0.0
          %366 = vst [vmem:[#allocation2 + $0x1e8] sm:$0xff] 0.0
          %367 = vst [vmem:[#allocation2 + $0x1f0] sm:$0xff] 0.0
          %368 = vst [vmem:[#allocation2 + $0x1f8] sm:$0xff] 0.0
        $region40: #{tpu_custom_call.1} parent=35 // pred_fallthru
          _
        %v369 = vld [vmem:[#allocation2] sm:$0xff]
        %v370 = vld [vmem:[#allocation2 + $0x8] sm:$0xff]
        %v371 = vld [vmem:[#allocation2 + $0x10] sm:$0xff]
        %v372 = vld [vmem:[#allocation2 + $0x18] sm:$0xff]
        %v373 = vld [vmem:[#allocation2 + $0x20] sm:$0xff]
        %v374 = vld [vmem:[#allocation2 + $0x28] sm:$0xff]
        %v375 = vld [vmem:[#allocation2 + $0x30] sm:$0xff]
        %v376 = vld [vmem:[#allocation2 + $0x38] sm:$0xff]
        %v377 = vld [vmem:[#allocation2 + $0x40] sm:$0xff]
        %v378 = vld [vmem:[#allocation2 + $0x48] sm:$0xff]
        %v379 = vld [vmem:[#allocation2 + $0x50] sm:$0xff]
        %v380 = vld [vmem:[#allocation2 + $0x58] sm:$0xff]
        %v381 = vld [vmem:[#allocation2 + $0x60] sm:$0xff]
        %v382 = vld [vmem:[#allocation2 + $0x68] sm:$0xff]
        %v383 = vld [vmem:[#allocation2 + $0x70] sm:$0xff]
        %v384 = vld [vmem:[#allocation2 + $0x78] sm:$0xff]
        %v385 = vld [vmem:[#allocation2 + $0x80] sm:$0xff]
        %v386 = vld [vmem:[#allocation2 + $0x88] sm:$0xff]
        %v387 = vld [vmem:[#allocation2 + $0x90] sm:$0xff]
        %v388 = vld [vmem:[#allocation2 + $0x98] sm:$0xff]
        %v389 = vld [vmem:[#allocation2 + $0xa0] sm:$0xff]
        %v390 = vld [vmem:[#allocation2 + $0xa8] sm:$0xff]
        %v391 = vld [vmem:[#allocation2 + $0xb0] sm:$0xff]
        %v392 = vld [vmem:[#allocation2 + $0xb8] sm:$0xff]
        %v393 = vld [vmem:[#allocation2 + $0xc0] sm:$0xff]
        %v394 = vld [vmem:[#allocation2 + $0xc8] sm:$0xff]
        %v395 = vld [vmem:[#allocation2 + $0xd0] sm:$0xff]
        %v396 = vld [vmem:[#allocation2 + $0xd8] sm:$0xff]
        %v397 = vld [vmem:[#allocation2 + $0xe0] sm:$0xff]
        %v398 = vld [vmem:[#allocation2 + $0xe8] sm:$0xff]
        %v399 = vld [vmem:[#allocation2 + $0xf0] sm:$0xff]
        %v400 = vld [vmem:[#allocation2 + $0xf8] sm:$0xff]
        %v401 = vld [vmem:[#allocation2 + $0x100] sm:$0xff]
        %v402 = vld [vmem:[#allocation2 + $0x108] sm:$0xff]
        %v403 = vld [vmem:[#allocation2 + $0x110] sm:$0xff]
        %v404 = vld [vmem:[#allocation2 + $0x118] sm:$0xff]
        %v405 = vld [vmem:[#allocation2 + $0x120] sm:$0xff]
        %v406 = vld [vmem:[#allocation2 + $0x128] sm:$0xff]
        %v407 = vld [vmem:[#allocation2 + $0x130] sm:$0xff]
        %v408 = vld [vmem:[#allocation2 + $0x138] sm:$0xff]
        %v409 = vld [vmem:[#allocation2 + $0x140] sm:$0xff]
        %v410 = vld [vmem:[#allocation2 + $0x148] sm:$0xff]
        %v411 = vld [vmem:[#allocation2 + $0x150] sm:$0xff]
        %v412 = vld [vmem:[#allocation2 + $0x158] sm:$0xff]
        %v413 = vld [vmem:[#allocation2 + $0x160] sm:$0xff]
        %v414 = vld [vmem:[#allocation2 + $0x168] sm:$0xff]
        %v415 = vld [vmem:[#allocation2 + $0x170] sm:$0xff]
        %v416 = vld [vmem:[#allocation2 + $0x178] sm:$0xff]
        %v417 = vld [vmem:[#allocation2 + $0x180] sm:$0xff]
        %v418 = vld [vmem:[#allocation2 + $0x188] sm:$0xff]
        %v419 = vld [vmem:[#allocation2 + $0x190] sm:$0xff]
        %v420 = vld [vmem:[#allocation2 + $0x198] sm:$0xff]
        %v421 = vld [vmem:[#allocation2 + $0x1a0] sm:$0xff]
        %v422 = vld [vmem:[#allocation2 + $0x1a8] sm:$0xff]
        %v423 = vld [vmem:[#allocation2 + $0x1b0] sm:$0xff]
        %v424 = vld [vmem:[#allocation2 + $0x1b8] sm:$0xff]
        %v425 = vld [vmem:[#allocation2 + $0x1c0] sm:$0xff]
        %v426 = vld [vmem:[#allocation2 + $0x1c8] sm:$0xff]
        %v427 = vld [vmem:[#allocation2 + $0x1d0] sm:$0xff]
        %v428 = vld [vmem:[#allocation2 + $0x1d8] sm:$0xff]
        %v429 = vld [vmem:[#allocation2 + $0x1e0] sm:$0xff]
        %v430 = vld [vmem:[#allocation2 + $0x1e8] sm:$0xff]
        %v431 = vld [vmem:[#allocation2 + $0x1f0] sm:$0xff]
        %v432 = vld [vmem:[#allocation2 + $0x1f8] sm:$0xff]
        %v433 = vld [vmem:[%s281] sm:$0xff]
        %v434 = vld [vmem:[%s281 + $0x8] sm:$0xff]
        %v435 = vld [vmem:[%s281 + $0x10] sm:$0xff]
        %v436 = vld [vmem:[%s281 + $0x18] sm:$0xff]
        %v437 = vld [vmem:[%s281 + $0x20] sm:$0xff]
        %v438 = vld [vmem:[%s281 + $0x28] sm:$0xff]
        %v439 = vld [vmem:[%s281 + $0x30] sm:$0xff]
        %v440 = vld [vmem:[%s281 + $0x38] sm:$0xff]
        %v441 = vld [vmem:[%s281 + $0x40] sm:$0xff]
        %v442 = vld [vmem:[%s281 + $0x48] sm:$0xff]
        %v443 = vld [vmem:[%s281 + $0x50] sm:$0xff]
        %v444 = vld [vmem:[%s281 + $0x58] sm:$0xff]
        %v445 = vld [vmem:[%s281 + $0x60] sm:$0xff]
        %v446 = vld [vmem:[%s281 + $0x68] sm:$0xff]
        %v447 = vld [vmem:[%s281 + $0x70] sm:$0xff]
        %v448 = vld [vmem:[%s281 + $0x78] sm:$0xff]
        %v449 = vld [vmem:[%s281 + $0x80] sm:$0xff]
        %v450 = vld [vmem:[%s281 + $0x88] sm:$0xff]
        %v451 = vld [vmem:[%s281 + $0x90] sm:$0xff]
        %v452 = vld [vmem:[%s281 + $0x98] sm:$0xff]
        %v453 = vld [vmem:[%s281 + $0xa0] sm:$0xff]
        %v454 = vld [vmem:[%s281 + $0xa8] sm:$0xff]
        %v455 = vld [vmem:[%s281 + $0xb0] sm:$0xff]
        %v456 = vld [vmem:[%s281 + $0xb8] sm:$0xff]
        %v457 = vld [vmem:[%s281 + $0xc0] sm:$0xff]
        %v458 = vld [vmem:[%s281 + $0xc8] sm:$0xff]
        %v459 = vld [vmem:[%s281 + $0xd0] sm:$0xff]
        %v460 = vld [vmem:[%s281 + $0xd8] sm:$0xff]
        %v461 = vld [vmem:[%s281 + $0xe0] sm:$0xff]
        %v462 = vld [vmem:[%s281 + $0xe8] sm:$0xff]
        %v463 = vld [vmem:[%s281 + $0xf0] sm:$0xff]
        %v464 = vld [vmem:[%s281 + $0xf8] sm:$0xff]
        %v465 = vld [vmem:[%s281 + $0x100] sm:$0xff]
        %v466 = vld [vmem:[%s281 + $0x108] sm:$0xff]
        %v467 = vld [vmem:[%s281 + $0x110] sm:$0xff]
        %v468 = vld [vmem:[%s281 + $0x118] sm:$0xff]
        %v469 = vld [vmem:[%s281 + $0x120] sm:$0xff]
        %v470 = vld [vmem:[%s281 + $0x128] sm:$0xff]
        %v471 = vld [vmem:[%s281 + $0x130] sm:$0xff]
        %v472 = vld [vmem:[%s281 + $0x138] sm:$0xff]
        %v473 = vld [vmem:[%s281 + $0x140] sm:$0xff]
        %v474 = vld [vmem:[%s281 + $0x148] sm:$0xff]
        %v475 = vld [vmem:[%s281 + $0x150] sm:$0xff]
        %v476 = vld [vmem:[%s281 + $0x158] sm:$0xff]
        %v477 = vld [vmem:[%s281 + $0x160] sm:$0xff]
        %v478 = vld [vmem:[%s281 + $0x168] sm:$0xff]
        %v479 = vld [vmem:[%s281 + $0x170] sm:$0xff]
        %v480 = vld [vmem:[%s281 + $0x178] sm:$0xff]
        %v481 = vld [vmem:[%s281 + $0x180] sm:$0xff]
        %v482 = vld [vmem:[%s281 + $0x188] sm:$0xff]
        %v483 = vld [vmem:[%s281 + $0x190] sm:$0xff]
        %v484 = vld [vmem:[%s281 + $0x198] sm:$0xff]
        %v485 = vld [vmem:[%s281 + $0x1a0] sm:$0xff]
        %v486 = vld [vmem:[%s281 + $0x1a8] sm:$0xff]
        %v487 = vld [vmem:[%s281 + $0x1b0] sm:$0xff]
        %v488 = vld [vmem:[%s281 + $0x1b8] sm:$0xff]
        %v489 = vld [vmem:[%s281 + $0x1c0] sm:$0xff]
        %v490 = vld [vmem:[%s281 + $0x1c8] sm:$0xff]
        %v491 = vld [vmem:[%s281 + $0x1d0] sm:$0xff]
        %v492 = vld [vmem:[%s281 + $0x1d8] sm:$0xff]
        %v493 = vld [vmem:[%s281 + $0x1e0] sm:$0xff]
        %v494 = vld [vmem:[%s281 + $0x1e8] sm:$0xff]
        %v495 = vld [vmem:[%s281 + $0x1f0] sm:$0xff]
        %v496 = vld [vmem:[%s281 + $0x1f8] sm:$0xff]
        %v497 = vld [vmem:[%s291] sm:$0xf]
        %v498 = vld [vmem:[%s291 + $0x4] sm:$0xf]
        %v499 = vld [vmem:[%s291 + $0x8] sm:$0xf]
        %v500 = vld [vmem:[%s291 + $0xc] sm:$0xf]
        %v501 = vld [vmem:[%s291 + $0x10] sm:$0xf]
        %v502 = vld [vmem:[%s291 + $0x14] sm:$0xf]
        %v503 = vld [vmem:[%s291 + $0x18] sm:$0xf]
        %v504 = vld [vmem:[%s291 + $0x1c] sm:$0xf]
        %v505 = vld [vmem:[%s291 + $0x20] sm:$0xf]
        %v506 = vld [vmem:[%s291 + $0x24] sm:$0xf]
        %v507 = vld [vmem:[%s291 + $0x28] sm:$0xf]
        %v508 = vld [vmem:[%s291 + $0x2c] sm:$0xf]
        %v509 = vld [vmem:[%s291 + $0x30] sm:$0xf]
        %v510 = vld [vmem:[%s291 + $0x34] sm:$0xf]
        %v511 = vld [vmem:[%s291 + $0x38] sm:$0xf]
        %v512 = vld [vmem:[%s291 + $0x3c] sm:$0xf]
        %v513 = vld [vmem:[%s291 + $0x40] sm:$0xf]
        %v514 = vld [vmem:[%s291 + $0x44] sm:$0xf]
        %v515 = vld [vmem:[%s291 + $0x48] sm:$0x3]
        %v580 = vunpack.c.l.b16 %v433
        %v581 = vunpack.c.h.b16 %v433
        %v582 = vunpack.c.l.b16 %v434
        %v583 = vunpack.c.h.b16 %v434
        %v584 = vunpack.c.l.b16 %v435
        %v585 = vunpack.c.h.b16 %v435
        %v586 = vunpack.c.l.b16 %v436
        %v587 = vunpack.c.h.b16 %v436
        %v588 = vunpack.c.l.b16 %v437
        %v589 = vunpack.c.h.b16 %v437
        %v590 = vunpack.c.l.b16 %v438
        %v591 = vunpack.c.h.b16 %v438
        %v592 = vunpack.c.l.b16 %v439
        %v593 = vunpack.c.h.b16 %v439
        %v594 = vunpack.c.l.b16 %v440
        %v595 = vunpack.c.h.b16 %v440
        %v596 = vunpack.c.l.b16 %v441
        %v597 = vunpack.c.h.b16 %v441
        %v598 = vunpack.c.l.b16 %v442
        %v599 = vunpack.c.h.b16 %v442
        %v600 = vunpack.c.l.b16 %v443
        %v601 = vunpack.c.h.b16 %v443
        %v602 = vunpack.c.l.b16 %v444
        %v603 = vunpack.c.h.b16 %v444
        %v604 = vunpack.c.l.b16 %v445
        %v605 = vunpack.c.h.b16 %v445
        %v606 = vunpack.c.l.b16 %v446
        %v607 = vunpack.c.h.b16 %v446
        %v608 = vunpack.c.l.b16 %v447
        %v609 = vunpack.c.h.b16 %v447
        %v610 = vunpack.c.l.b16 %v448
        %v611 = vunpack.c.h.b16 %v448
        %v612 = vunpack.c.l.b16 %v449
        %v613 = vunpack.c.h.b16 %v449
        %v614 = vunpack.c.l.b16 %v450
        %v615 = vunpack.c.h.b16 %v450
        %v616 = vunpack.c.l.b16 %v451
        %v617 = vunpack.c.h.b16 %v451
        %v618 = vunpack.c.l.b16 %v452
        %v619 = vunpack.c.h.b16 %v452
        %v620 = vunpack.c.l.b16 %v453
        %v621 = vunpack.c.h.b16 %v453
        %v622 = vunpack.c.l.b16 %v454
        %v623 = vunpack.c.h.b16 %v454
        %v624 = vunpack.c.l.b16 %v455
        %v625 = vunpack.c.h.b16 %v455
        %v626 = vunpack.c.l.b16 %v456
        %v627 = vunpack.c.h.b16 %v456
        %v628 = vunpack.c.l.b16 %v457
        %v629 = vunpack.c.h.b16 %v457
        %v630 = vunpack.c.l.b16 %v458
        %v631 = vunpack.c.h.b16 %v458
        %v632 = vunpack.c.l.b16 %v459
        %v633 = vunpack.c.h.b16 %v459
        %v634 = vunpack.c.l.b16 %v460
        %v635 = vunpack.c.h.b16 %v460
        %v636 = vunpack.c.l.b16 %v461
        %v637 = vunpack.c.h.b16 %v461
        %v638 = vunpack.c.l.b16 %v462
        %v639 = vunpack.c.h.b16 %v462
        %v640 = vunpack.c.l.b16 %v463
        %v641 = vunpack.c.h.b16 %v463
        %v642 = vunpack.c.l.b16 %v464
        %v643 = vunpack.c.h.b16 %v464
        %v644 = vunpack.c.l.b16 %v465
        %v645 = vunpack.c.h.b16 %v465
        %v646 = vunpack.c.l.b16 %v466
        %v647 = vunpack.c.h.b16 %v466
        %v648 = vunpack.c.l.b16 %v467
        %v649 = vunpack.c.h.b16 %v467
        %v650 = vunpack.c.l.b16 %v468
        %v651 = vunpack.c.h.b16 %v468
        %v652 = vunpack.c.l.b16 %v469
        %v653 = vunpack.c.h.b16 %v469
        %v654 = vunpack.c.l.b16 %v470
        %v655 = vunpack.c.h.b16 %v470
        %v656 = vunpack.c.l.b16 %v471
        %v657 = vunpack.c.h.b16 %v471
        %v658 = vunpack.c.l.b16 %v472
        %v659 = vunpack.c.h.b16 %v472
        %v660 = vunpack.c.l.b16 %v473
        %v661 = vunpack.c.h.b16 %v473
        %v662 = vunpack.c.l.b16 %v474
        %v663 = vunpack.c.h.b16 %v474
        %v664 = vunpack.c.l.b16 %v475
        %v665 = vunpack.c.h.b16 %v475
        %v666 = vunpack.c.l.b16 %v476
        %v667 = vunpack.c.h.b16 %v476
        %v668 = vunpack.c.l.b16 %v477
        %v669 = vunpack.c.h.b16 %v477
        %v670 = vunpack.c.l.b16 %v478
        %v671 = vunpack.c.h.b16 %v478
        %v672 = vunpack.c.l.b16 %v479
        %v673 = vunpack.c.h.b16 %v479
        %v674 = vunpack.c.l.b16 %v480
        %v675 = vunpack.c.h.b16 %v480
        %v676 = vunpack.c.l.b16 %v481
        %v677 = vunpack.c.h.b16 %v481
        %v678 = vunpack.c.l.b16 %v482
        %v679 = vunpack.c.h.b16 %v482
        %v680 = vunpack.c.l.b16 %v483
        %v681 = vunpack.c.h.b16 %v483
        %v682 = vunpack.c.l.b16 %v484
        %v683 = vunpack.c.h.b16 %v484
        %v684 = vunpack.c.l.b16 %v485
        %v685 = vunpack.c.h.b16 %v485
        %v686 = vunpack.c.l.b16 %v486
        %v687 = vunpack.c.h.b16 %v486
        %v688 = vunpack.c.l.b16 %v487
        %v689 = vunpack.c.h.b16 %v487
        %v690 = vunpack.c.l.b16 %v488
        %v691 = vunpack.c.h.b16 %v488
        %v692 = vunpack.c.l.b16 %v489
        %v693 = vunpack.c.h.b16 %v489
        %v694 = vunpack.c.l.b16 %v490
        %v695 = vunpack.c.h.b16 %v490
        %v696 = vunpack.c.l.b16 %v491
        %v697 = vunpack.c.h.b16 %v491
        %v698 = vunpack.c.l.b16 %v492
        %v699 = vunpack.c.h.b16 %v492
        %v700 = vunpack.c.l.b16 %v493
        %v701 = vunpack.c.h.b16 %v493
        %v702 = vunpack.c.l.b16 %v494
        %v703 = vunpack.c.h.b16 %v494
        %v704 = vunpack.c.l.b16 %v495
        %v705 = vunpack.c.h.b16 %v495
        %v706 = vunpack.c.l.b16 %v496
        %v707 = vunpack.c.h.b16 %v496
        %v708 = vpack.c.b16 %v582, %v580
        %v709 = vpack.c.b16 %v583, %v581
        %v710 = vpack.c.b16 %v586, %v584
        %v711 = vpack.c.b16 %v587, %v585
        %v712 = vpack.c.b16 %v590, %v588
        %v713 = vpack.c.b16 %v591, %v589
        %v714 = vpack.c.b16 %v594, %v592
        %v715 = vpack.c.b16 %v595, %v593
        %v716 = vpack.c.b16 %v598, %v596
        %v717 = vpack.c.b16 %v599, %v597
        %v718 = vpack.c.b16 %v602, %v600
        %v719 = vpack.c.b16 %v603, %v601
        %v720 = vpack.c.b16 %v606, %v604
        %v721 = vpack.c.b16 %v607, %v605
        %v722 = vpack.c.b16 %v610, %v608
        %v723 = vpack.c.b16 %v611, %v609
        %v724 = vpack.c.b16 %v614, %v612
        %v725 = vpack.c.b16 %v615, %v613
        %v726 = vpack.c.b16 %v618, %v616
        %v727 = vpack.c.b16 %v619, %v617
        %v728 = vpack.c.b16 %v622, %v620
        %v729 = vpack.c.b16 %v623, %v621
        %v730 = vpack.c.b16 %v626, %v624
        %v731 = vpack.c.b16 %v627, %v625
        %v732 = vpack.c.b16 %v630, %v628
        %v733 = vpack.c.b16 %v631, %v629
        %v734 = vpack.c.b16 %v634, %v632
        %v735 = vpack.c.b16 %v635, %v633
        %v736 = vpack.c.b16 %v638, %v636
        %v737 = vpack.c.b16 %v639, %v637
        %v738 = vpack.c.b16 %v642, %v640
        %v739 = vpack.c.b16 %v643, %v641
        %v740 = vpack.c.b16 %v646, %v644
        %v741 = vpack.c.b16 %v647, %v645
        %v742 = vpack.c.b16 %v650, %v648
        %v743 = vpack.c.b16 %v651, %v649
        %v744 = vpack.c.b16 %v654, %v652
        %v745 = vpack.c.b16 %v655, %v653
        %v746 = vpack.c.b16 %v658, %v656
        %v747 = vpack.c.b16 %v659, %v657
        %v748 = vpack.c.b16 %v662, %v660
        %v749 = vpack.c.b16 %v663, %v661
        %v750 = vpack.c.b16 %v666, %v664
        %v751 = vpack.c.b16 %v667, %v665
        %v752 = vpack.c.b16 %v670, %v668
        %v753 = vpack.c.b16 %v671, %v669
        %v754 = vpack.c.b16 %v674, %v672
        %v755 = vpack.c.b16 %v675, %v673
        %v756 = vpack.c.b16 %v678, %v676
        %v757 = vpack.c.b16 %v679, %v677
        %v758 = vpack.c.b16 %v682, %v680
        %v759 = vpack.c.b16 %v683, %v681
        %v760 = vpack.c.b16 %v686, %v684
        %v761 = vpack.c.b16 %v687, %v685
        %v762 = vpack.c.b16 %v690, %v688
        %v763 = vpack.c.b16 %v691, %v689
        %v764 = vpack.c.b16 %v694, %v692
        %v765 = vpack.c.b16 %v695, %v693
        %v766 = vpack.c.b16 %v698, %v696
        %v767 = vpack.c.b16 %v699, %v697
        %v768 = vpack.c.b16 %v702, %v700
        %v769 = vpack.c.b16 %v703, %v701
        %v770 = vpack.c.b16 %v706, %v704
        %v771 = vpack.c.b16 %v707, %v705
        %v823 = vunpack.c.l.b16 %v497
        %v824 = vunpack.c.l.b16 %v498
        %v825 = vunpack.c.l.b16 %v499
        %v826 = vunpack.c.l.b16 %v500
        %v827 = vunpack.c.l.b16 %v501
        %v828 = vunpack.c.l.b16 %v502
        %v829 = vunpack.c.l.b16 %v503
        %v830 = vunpack.c.l.b16 %v504
        %v831 = vunpack.c.l.b16 %v505
        %v832 = vunpack.c.l.b16 %v506
        %v833 = vunpack.c.l.b16 %v507
        %v834 = vunpack.c.l.b16 %v508
        %v835 = vunpack.c.l.b16 %v509
        %v836 = vunpack.c.l.b16 %v510
        %v837 = vunpack.c.l.b16 %v511
        %v838 = vunpack.c.l.b16 %v512
        %v839 = vunpack.c.l.b16 %v513
        %v840 = vunpack.c.l.b16 %v514
        %v841 = vunpack.c.l.b16 %v515
        %v842 = vpack.c.b16 %v824, %v823
        %v843 = vpack.c.b16 %v826, %v825
        %v844 = vpack.c.b16 %v828, %v827
        %v845 = vpack.c.b16 %v830, %v829
        %v846 = vpack.c.b16 %v832, %v831
        %v847 = vpack.c.b16 %v834, %v833
        %v848 = vpack.c.b16 %v836, %v835
        %v849 = vpack.c.b16 %v838, %v837
        %v850 = vpack.c.b16 %v840, %v839
        %v851 = vpack.c.b16 %v841, %v841
        %vm861 = vcmask 154624
        %v863 = vsel %vm861, %v709, 0
        %v866 = vsel %vm861, %v711, 0
        %v869 = vsel %vm861, %v713, 0
        %v872 = vsel %vm861, %v715, 0
        %v875 = vsel %vm861, %v717, 0
        %v878 = vsel %vm861, %v719, 0
        %v881 = vsel %vm861, %v721, 0
        %v884 = vsel %vm861, %v723, 0
        %v887 = vsel %vm861, %v725, 0
        %v890 = vsel %vm861, %v727, 0
        %v893 = vsel %vm861, %v729, 0
        %v896 = vsel %vm861, %v731, 0
        %v899 = vsel %vm861, %v733, 0
        %v902 = vsel %vm861, %v735, 0
        %v905 = vsel %vm861, %v737, 0
        %v908 = vsel %vm861, %v739, 0
        %v911 = vsel %vm861, %v741, 0
        %v914 = vsel %vm861, %v743, 0
        %v917 = vsel %vm861, %v745, 0
        %v920 = vsel %vm861, %v747, 0
        %v923 = vsel %vm861, %v749, 0
        %v926 = vsel %vm861, %v751, 0
        %v929 = vsel %vm861, %v753, 0
        %v932 = vsel %vm861, %v755, 0
        %v935 = vsel %vm861, %v757, 0
        %v938 = vsel %vm861, %v759, 0
        %v941 = vsel %vm861, %v761, 0
        %v944 = vsel %vm861, %v763, 0
        %v947 = vsel %vm861, %v765, 0
        %v950 = vsel %vm861, %v767, 0
        %v953 = vsel %vm861, %v769, 0
        %v956 = vsel %vm861, %v771, 0
        %vm958 = vcmask 1040384
        %vm959 = vcmask 1041408
        %v960 = vsel %vm958, 4294967295, 65535
        %v961 = vsel %vm959, %v960, 0
        %v963 = vand.u32 %v851, %v961
        %965 = vmatprep.subr.bf16.mxu0 0
        %966 = vmatpush1.bf16.msra.mxu0 %v842
        %967 = vmatprep.subr.bf16.mxu0 0
        %968 = vmatpush1.bf16.msra.mxu0 %v843
        %969 = vmatprep.subr.bf16.mxu0 0
        %970 = vmatpush1.bf16.msra.mxu0 %v844
        %971 = vmatprep.subr.bf16.mxu0 0
        %972 = vmatpush1.bf16.msra.mxu0 %v845
        %973 = vmatprep.subr.bf16.mxu0 0
        %974 = vmatpush1.bf16.msra.mxu0 %v846
        %975 = vmatprep.subr.bf16.mxu0 0
        %976 = vmatpush1.bf16.msra.mxu0 %v847
        %977 = vmatprep.subr.bf16.mxu0 0
        %978 = vmatpush1.bf16.msra.mxu0 %v848
        %979 = vmatprep.subr.bf16.mxu0 0
        %980 = vmatpush1.bf16.msra.mxu0 %v849
        %981 = vmatprep.subr.bf16.mxu0 0
        %982 = vmatpush1.bf16.msra.mxu0 %v850
        %983 = vmatprep.subr.bf16.mxu0 0
        %984 = vmatpush1.bf16.msra.mxu0 %v963
        %985 = vmatprep.subr.bf16.mxu0 0
        %986 = vmatpush1.bf16.msra.mxu0 0
        %987 = vmatprep.subr.bf16.mxu0 0
        %988 = vmatpush1.bf16.msra.mxu0 0
        %989 = vmatprep.subr.bf16.mxu0 0
        %990 = vmatpush1.bf16.msra.mxu0 0
        %991 = vmatprep.subr.bf16.mxu0 0
        %992 = vmatpush1.bf16.msra.mxu0 0
        %993 = vmatprep.subr.bf16.mxu0 0
        %994 = vmatpush1.bf16.msra.mxu0 0
        %995 = vmatprep.subr.bf16.mxu0 0
        %996 = vmatpush1.bf16.msra.mxu0 0
        %997 = vmatprep.mubr.bf16.mxu0 %v863
        %998 = vmatmul.mubr.bf16.gmra.mrb[0].mxu0 %v708
        %v999 = vpop.f32.mrb[0].mxu0
        %v1000 = vadd.f32 0.0, %v999
        %v1001 = vpop.f32.mrb[0].mxu0
        %v1002 = vpop.f32.mrb[0].mxu0
        %v1003 = vadd.f32 0.0, %v1002
        %v1004 = vpop.f32.mrb[0].mxu0
        %1005 = vmatprep.mubr.bf16.mxu0 %v866
        %1006 = vmatmul.mubr.bf16.gmra.mrb[0].mxu0 %v710
        %v1007 = vpop.f32.mrb[0].mxu0
        %v1008 = vadd.f32 0.0, %v1007
        %v1009 = vpop.f32.mrb[0].mxu0
        %v1010 = vpop.f32.mrb[0].mxu0
        %v1011 = vadd.f32 0.0, %v1010
        %v1012 = vpop.f32.mrb[0].mxu0
        %1013 = vmatprep.mubr.bf16.mxu0 %v869
        %1014 = vmatmul.mubr.bf16.gmra.mrb[0].mxu0 %v712
        %v1015 = vpop.f32.mrb[0].mxu0
        %v1016 = vadd.f32 0.0, %v1015
        %v1017 = vpop.f32.mrb[0].mxu0
        %v1018 = vpop.f32.mrb[0].mxu0
        %v1019 = vadd.f32 0.0, %v1018
        %v1020 = vpop.f32.mrb[0].mxu0
        %1021 = vmatprep.mubr.bf16.mxu0 %v872
        %1022 = vmatmul.mubr.bf16.gmra.mrb[0].mxu0 %v714
        %v1023 = vpop.f32.mrb[0].mxu0
        %v1024 = vadd.f32 0.0, %v1023
        %v1025 = vpop.f32.mrb[0].mxu0
        %v1026 = vpop.f32.mrb[0].mxu0
        %v1027 = vadd.f32 0.0, %v1026
        %v1028 = vpop.f32.mrb[0].mxu0
        %1029 = vmatprep.mubr.bf16.mxu0 %v875
        %1030 = vmatmul.mubr.bf16.gmra.mrb[0].mxu0 %v716
        %v1031 = vpop.f32.mrb[0].mxu0
        %v1032 = vadd.f32 0.0, %v1031
        %v1033 = vpop.f32.mrb[0].mxu0
        %v1034 = vpop.f32.mrb[0].mxu0
        %v1035 = vadd.f32 0.0, %v1034
        %v1036 = vpop.f32.mrb[0].mxu0
        %1037 = vmatprep.mubr.bf16.mxu0 %v878
        %1038 = vmatmul.mubr.bf16.gmra.mrb[0].mxu0 %v718
        %v1039 = vpop.f32.mrb[0].mxu0
        %v1040 = vadd.f32 0.0, %v1039
        %v1041 = vpop.f32.mrb[0].mxu0
        %v1042 = vpop.f32.mrb[0].mxu0
        %v1043 = vadd.f32 0.0, %v1042
        %v1044 = vpop.f32.mrb[0].mxu0
        %1045 = vmatprep.mubr.bf16.mxu0 %v881
        %1046 = vmatmul.mubr.bf16.gmra.mrb[0].mxu0 %v720
        %v1047 = vpop.f32.mrb[0].mxu0
        %v1048 = vadd.f32 0.0, %v1047
        %v1049 = vpop.f32.mrb[0].mxu0
        %v1050 = vpop.f32.mrb[0].mxu0
        %v1051 = vadd.f32 0.0, %v1050
        %v1052 = vpop.f32.mrb[0].mxu0
        %1053 = vmatprep.mubr.bf16.mxu0 %v884
        %1054 = vmatmul.mubr.bf16.gmra.mrb[0].mxu0 %v722
        %v1055 = vpop.f32.mrb[0].mxu0
        %v1056 = vadd.f32 0.0, %v1055
        %v1057 = vpop.f32.mrb[0].mxu0
        %v1058 = vpop.f32.mrb[0].mxu0
        %v1059 = vadd.f32 0.0, %v1058
        %v1060 = vpop.f32.mrb[0].mxu0
        %1061 = vmatprep.mubr.bf16.mxu0 %v887
        %1062 = vmatmul.mubr.bf16.gmra.mrb[0].mxu0 %v724
        %v1063 = vpop.f32.mrb[0].mxu0
        %v1064 = vadd.f32 0.0, %v1063
        %v1065 = vpop.f32.mrb[0].mxu0
        %v1066 = vpop.f32.mrb[0].mxu0
        %v1067 = vadd.f32 0.0, %v1066
        %v1068 = vpop.f32.mrb[0].mxu0
        %1069 = vmatprep.mubr.bf16.mxu0 %v890
        %1070 = vmatmul.mubr.bf16.gmra.mrb[0].mxu0 %v726
        %v1071 = vpop.f32.mrb[0].mxu0
        %v1072 = vadd.f32 0.0, %v1071
        %v1073 = vpop.f32.mrb[0].mxu0
        %v1074 = vpop.f32.mrb[0].mxu0
        %v1075 = vadd.f32 0.0, %v1074
        %v1076 = vpop.f32.mrb[0].mxu0
        %1077 = vmatprep.mubr.bf16.mxu0 %v893
        %1078 = vmatmul.mubr.bf16.gmra.mrb[0].mxu0 %v728
        %v1079 = vpop.f32.mrb[0].mxu0
        %v1080 = vadd.f32 0.0, %v1079
        %v1081 = vpop.f32.mrb[0].mxu0
        %v1082 = vpop.f32.mrb[0].mxu0
        %v1083 = vadd.f32 0.0, %v1082
        %v1084 = vpop.f32.mrb[0].mxu0
        %1085 = vmatprep.mubr.bf16.mxu0 %v896
        %1086 = vmatmul.mubr.bf16.gmra.mrb[0].mxu0 %v730
        %v1087 = vpop.f32.mrb[0].mxu0
        %v1088 = vadd.f32 0.0, %v1087
        %v1089 = vpop.f32.mrb[0].mxu0
        %v1090 = vpop.f32.mrb[0].mxu0
        %v1091 = vadd.f32 0.0, %v1090
        %v1092 = vpop.f32.mrb[0].mxu0
        %1093 = vmatprep.mubr.bf16.mxu0 %v899
        %1094 = vmatmul.mubr.bf16.gmra.mrb[0].mxu0 %v732
        %v1095 = vpop.f32.mrb[0].mxu0
        %v1096 = vadd.f32 0.0, %v1095
        %v1097 = vpop.f32.mrb[0].mxu0
        %v1098 = vpop.f32.mrb[0].mxu0
        %v1099 = vadd.f32 0.0, %v1098
        %v1100 = vpop.f32.mrb[0].mxu0
        %1101 = vmatprep.mubr.bf16.mxu0 %v902
        %1102 = vmatmul.mubr.bf16.gmra.mrb[0].mxu0 %v734
        %v1103 = vpop.f32.mrb[0].mxu0
        %v1104 = vadd.f32 0.0, %v1103
        %v1105 = vpop.f32.mrb[0].mxu0
        %v1106 = vpop.f32.mrb[0].mxu0
        %v1107 = vadd.f32 0.0, %v1106
        %v1108 = vpop.f32.mrb[0].mxu0
        %1109 = vmatprep.mubr.bf16.mxu0 %v905
        %1110 = vmatmul.mubr.bf16.gmra.mrb[0].mxu0 %v736
        %v1111 = vpop.f32.mrb[0].mxu0
        %v1112 = vadd.f32 0.0, %v1111
        %v1113 = vpop.f32.mrb[0].mxu0
        %v1114 = vpop.f32.mrb[0].mxu0
        %v1115 = vadd.f32 0.0, %v1114
        %v1116 = vpop.f32.mrb[0].mxu0
        %1117 = vmatprep.mubr.bf16.mxu0 %v908
        %1118 = vmatmul.mubr.bf16.gmra.mrb[0].mxu0 %v738
        %v1119 = vpop.f32.mrb[0].mxu0
        %v1120 = vadd.f32 0.0, %v1119
        %v1121 = vpop.f32.mrb[0].mxu0
        %v1122 = vpop.f32.mrb[0].mxu0
        %v1123 = vadd.f32 0.0, %v1122
        %v1124 = vpop.f32.mrb[0].mxu0
        %1125 = vmatprep.mubr.bf16.mxu0 %v911
        %1126 = vmatmul.mubr.bf16.gmra.mrb[0].mxu0 %v740
        %v1127 = vpop.f32.mrb[0].mxu0
        %v1128 = vadd.f32 0.0, %v1127
        %v1129 = vpop.f32.mrb[0].mxu0
        %v1130 = vpop.f32.mrb[0].mxu0
        %v1131 = vadd.f32 0.0, %v1130
        %v1132 = vpop.f32.mrb[0].mxu0
        %1133 = vmatprep.mubr.bf16.mxu0 %v914
        %1134 = vmatmul.mubr.bf16.gmra.mrb[0].mxu0 %v742
        %v1135 = vpop.f32.mrb[0].mxu0
        %v1136 = vadd.f32 0.0, %v1135
        %v1137 = vpop.f32.mrb[0].mxu0
        %v1138 = vpop.f32.mrb[0].mxu0
        %v1139 = vadd.f32 0.0, %v1138
        %v1140 = vpop.f32.mrb[0].mxu0
        %1141 = vmatprep.mubr.bf16.mxu0 %v917
        %1142 = vmatmul.mubr.bf16.gmra.mrb[0].mxu0 %v744
        %v1143 = vpop.f32.mrb[0].mxu0
        %v1144 = vadd.f32 0.0, %v1143
        %v1145 = vpop.f32.mrb[0].mxu0
        %v1146 = vpop.f32.mrb[0].mxu0
        %v1147 = vadd.f32 0.0, %v1146
        %v1148 = vpop.f32.mrb[0].mxu0
        %1149 = vmatprep.mubr.bf16.mxu0 %v920
        %1150 = vmatmul.mubr.bf16.gmra.mrb[0].mxu0 %v746
        %v1151 = vpop.f32.mrb[0].mxu0
        %v1152 = vadd.f32 0.0, %v1151
        %v1153 = vpop.f32.mrb[0].mxu0
        %v1154 = vpop.f32.mrb[0].mxu0
        %v1155 = vadd.f32 0.0, %v1154
        %v1156 = vpop.f32.mrb[0].mxu0
        %1157 = vmatprep.mubr.bf16.mxu0 %v923
        %1158 = vmatmul.mubr.bf16.gmra.mrb[0].mxu0 %v748
        %v1159 = vpop.f32.mrb[0].mxu0
        %v1160 = vadd.f32 0.0, %v1159
        %v1161 = vpop.f32.mrb[0].mxu0
        %v1162 = vpop.f32.mrb[0].mxu0
        %v1163 = vadd.f32 0.0, %v1162
        %v1164 = vpop.f32.mrb[0].mxu0
        %1165 = vmatprep.mubr.bf16.mxu0 %v926
        %1166 = vmatmul.mubr.bf16.gmra.mrb[0].mxu0 %v750
        %v1167 = vpop.f32.mrb[0].mxu0
        %v1168 = vadd.f32 0.0, %v1167
        %v1169 = vpop.f32.mrb[0].mxu0
        %v1170 = vpop.f32.mrb[0].mxu0
        %v1171 = vadd.f32 0.0, %v1170
        %v1172 = vpop.f32.mrb[0].mxu0
        %1173 = vmatprep.mubr.bf16.mxu0 %v929
        %1174 = vmatmul.mubr.bf16.gmra.mrb[0].mxu0 %v752
        %v1175 = vpop.f32.mrb[0].mxu0
        %v1176 = vadd.f32 0.0, %v1175
        %v1177 = vpop.f32.mrb[0].mxu0
        %v1178 = vpop.f32.mrb[0].mxu0
        %v1179 = vadd.f32 0.0, %v1178
        %v1180 = vpop.f32.mrb[0].mxu0
        %1181 = vmatprep.mubr.bf16.mxu0 %v932
        %1182 = vmatmul.mubr.bf16.gmra.mrb[0].mxu0 %v754
        %v1183 = vpop.f32.mrb[0].mxu0
        %v1184 = vadd.f32 0.0, %v1183
        %v1185 = vpop.f32.mrb[0].mxu0
        %v1186 = vpop.f32.mrb[0].mxu0
        %v1187 = vadd.f32 0.0, %v1186
        %v1188 = vpop.f32.mrb[0].mxu0
        %1189 = vmatprep.mubr.bf16.mxu0 %v935
        %1190 = vmatmul.mubr.bf16.gmra.mrb[0].mxu0 %v756
        %v1191 = vpop.f32.mrb[0].mxu0
        %v1192 = vadd.f32 0.0, %v1191
        %v1193 = vpop.f32.mrb[0].mxu0
        %v1194 = vpop.f32.mrb[0].mxu0
        %v1195 = vadd.f32 0.0, %v1194
        %v1196 = vpop.f32.mrb[0].mxu0
        %1197 = vmatprep.mubr.bf16.mxu0 %v938
        %1198 = vmatmul.mubr.bf16.gmra.mrb[0].mxu0 %v758
        %v1199 = vpop.f32.mrb[0].mxu0
        %v1200 = vadd.f32 0.0, %v1199
        %v1201 = vpop.f32.mrb[0].mxu0
        %v1202 = vpop.f32.mrb[0].mxu0
        %v1203 = vadd.f32 0.0, %v1202
        %v1204 = vpop.f32.mrb[0].mxu0
        %1205 = vmatprep.mubr.bf16.mxu0 %v941
        %1206 = vmatmul.mubr.bf16.gmra.mrb[0].mxu0 %v760
        %v1207 = vpop.f32.mrb[0].mxu0
        %v1208 = vadd.f32 0.0, %v1207
        %v1209 = vpop.f32.mrb[0].mxu0
        %v1210 = vpop.f32.mrb[0].mxu0
        %v1211 = vadd.f32 0.0, %v1210
        %v1212 = vpop.f32.mrb[0].mxu0
        %1213 = vmatprep.mubr.bf16.mxu0 %v944
        %1214 = vmatmul.mubr.bf16.gmra.mrb[0].mxu0 %v762
        %v1215 = vpop.f32.mrb[0].mxu0
        %v1216 = vadd.f32 0.0, %v1215
        %v1217 = vpop.f32.mrb[0].mxu0
        %v1218 = vpop.f32.mrb[0].mxu0
        %v1219 = vadd.f32 0.0, %v1218
        %v1220 = vpop.f32.mrb[0].mxu0
        %1221 = vmatprep.mubr.bf16.mxu0 %v947
        %1222 = vmatmul.mubr.bf16.gmra.mrb[0].mxu0 %v764
        %v1223 = vpop.f32.mrb[0].mxu0
        %v1224 = vadd.f32 0.0, %v1223
        %v1225 = vpop.f32.mrb[0].mxu0
        %v1226 = vpop.f32.mrb[0].mxu0
        %v1227 = vadd.f32 0.0, %v1226
        %v1228 = vpop.f32.mrb[0].mxu0
        %1229 = vmatprep.mubr.bf16.mxu0 %v950
        %1230 = vmatmul.mubr.bf16.gmra.mrb[0].mxu0 %v766
        %v1231 = vpop.f32.mrb[0].mxu0
        %v1232 = vadd.f32 0.0, %v1231
        %v1233 = vpop.f32.mrb[0].mxu0
        %v1234 = vpop.f32.mrb[0].mxu0
        %v1235 = vadd.f32 0.0, %v1234
        %v1236 = vpop.f32.mrb[0].mxu0
        %1237 = vmatprep.mubr.bf16.mxu0 %v953
        %1238 = vmatmul.mubr.bf16.gmra.mrb[0].mxu0 %v768
        %v1239 = vpop.f32.mrb[0].mxu0
        %v1240 = vadd.f32 0.0, %v1239
        %v1241 = vpop.f32.mrb[0].mxu0
        %v1242 = vpop.f32.mrb[0].mxu0
        %v1243 = vadd.f32 0.0, %v1242
        %v1244 = vpop.f32.mrb[0].mxu0
        %1245 = vmatprep.mubr.bf16.mxu0 %v956
        %1246 = vmatmul.mubr.bf16.gmra.mrb[0].mxu0 %v770
        %v1247 = vpop.f32.mrb[0].mxu0
        %v1248 = vadd.f32 0.0, %v1247
        %v1249 = vpop.f32.mrb[0].mxu0
        %v1250 = vpop.f32.mrb[0].mxu0
        %v1251 = vadd.f32 0.0, %v1250
        %v1252 = vpop.f32.mrb[0].mxu0
        %1253 = vdwg.mxu0
        %v1254 = vadd.f32 %v369, %v1000
        %v1255 = vadd.f32 %v370, %v1003
        %v1256 = vadd.f32 %v371, %v1008
        %v1257 = vadd.f32 %v372, %v1011
        %v1258 = vadd.f32 %v373, %v1016
        %v1259 = vadd.f32 %v374, %v1019
        %v1260 = vadd.f32 %v375, %v1024
        %v1261 = vadd.f32 %v376, %v1027
        %v1262 = vadd.f32 %v377, %v1032
        %v1263 = vadd.f32 %v378, %v1035
        %v1264 = vadd.f32 %v379, %v1040
        %v1265 = vadd.f32 %v380, %v1043
        %v1266 = vadd.f32 %v381, %v1048
        %v1267 = vadd.f32 %v382, %v1051
        %v1268 = vadd.f32 %v383, %v1056
        %v1269 = vadd.f32 %v384, %v1059
        %v1270 = vadd.f32 %v385, %v1064
        %v1271 = vadd.f32 %v386, %v1067
        %v1272 = vadd.f32 %v387, %v1072
        %v1273 = vadd.f32 %v388, %v1075
        %v1274 = vadd.f32 %v389, %v1080
        %v1275 = vadd.f32 %v390, %v1083
        %v1276 = vadd.f32 %v391, %v1088
        %v1277 = vadd.f32 %v392, %v1091
        %v1278 = vadd.f32 %v393, %v1096
        %v1279 = vadd.f32 %v394, %v1099
        %v1280 = vadd.f32 %v395, %v1104
        %v1281 = vadd.f32 %v396, %v1107
        %v1282 = vadd.f32 %v397, %v1112
        %v1283 = vadd.f32 %v398, %v1115
        %v1284 = vadd.f32 %v399, %v1120
        %v1285 = vadd.f32 %v400, %v1123
        %v1286 = vadd.f32 %v401, %v1128
        %v1287 = vadd.f32 %v402, %v1131
        %v1288 = vadd.f32 %v403, %v1136
        %v1289 = vadd.f32 %v404, %v1139
        %v1290 = vadd.f32 %v405, %v1144
        %v1291 = vadd.f32 %v406, %v1147
        %v1292 = vadd.f32 %v407, %v1152
        %v1293 = vadd.f32 %v408, %v1155
        %v1294 = vadd.f32 %v409, %v1160
        %v1295 = vadd.f32 %v410, %v1163
        %v1296 = vadd.f32 %v411, %v1168
        %v1297 = vadd.f32 %v412, %v1171
        %v1298 = vadd.f32 %v413, %v1176
        %v1299 = vadd.f32 %v414, %v1179
        %v1300 = vadd.f32 %v415, %v1184
        %v1301 = vadd.f32 %v416, %v1187
        %v1302 = vadd.f32 %v417, %v1192
        %v1303 = vadd.f32 %v418, %v1195
        %v1304 = vadd.f32 %v419, %v1200
        %v1305 = vadd.f32 %v420, %v1203
        %v1306 = vadd.f32 %v421, %v1208
        %v1307 = vadd.f32 %v422, %v1211
        %v1308 = vadd.f32 %v423, %v1216
        %v1309 = vadd.f32 %v424, %v1219
        %v1310 = vadd.f32 %v425, %v1224
        %v1311 = vadd.f32 %v426, %v1227
        %v1312 = vadd.f32 %v427, %v1232
        %v1313 = vadd.f32 %v428, %v1235
        %v1314 = vadd.f32 %v429, %v1240
        %v1315 = vadd.f32 %v430, %v1243
        %v1316 = vadd.f32 %v431, %v1248
        %v1317 = vadd.f32 %v432, %v1251
        %1318 = vst [vmem:[#allocation2] sm:$0xff] %v1254
        %1319 = vst [vmem:[#allocation2 + $0x8] sm:$0xff] %v1255
        %1320 = vst [vmem:[#allocation2 + $0x10] sm:$0xff] %v1256
        %1321 = vst [vmem:[#allocation2 + $0x18] sm:$0xff] %v1257
        %1322 = vst [vmem:[#allocation2 + $0x20] sm:$0xff] %v1258
        %1323 = vst [vmem:[#allocation2 + $0x28] sm:$0xff] %v1259
        %1324 = vst [vmem:[#allocation2 + $0x30] sm:$0xff] %v1260
        %1325 = vst [vmem:[#allocation2 + $0x38] sm:$0xff] %v1261
        %1326 = vst [vmem:[#allocation2 + $0x40] sm:$0xff] %v1262
        %1327 = vst [vmem:[#allocation2 + $0x48] sm:$0xff] %v1263
        %1328 = vst [vmem:[#allocation2 + $0x50] sm:$0xff] %v1264
        %1329 = vst [vmem:[#allocation2 + $0x58] sm:$0xff] %v1265
        %1330 = vst [vmem:[#allocation2 + $0x60] sm:$0xff] %v1266
        %1331 = vst [vmem:[#allocation2 + $0x68] sm:$0xff] %v1267
        %1332 = vst [vmem:[#allocation2 + $0x70] sm:$0xff] %v1268
        %1333 = vst [vmem:[#allocation2 + $0x78] sm:$0xff] %v1269
        %1334 = vst [vmem:[#allocation2 + $0x80] sm:$0xff] %v1270
        %1335 = vst [vmem:[#allocation2 + $0x88] sm:$0xff] %v1271
        %1336 = vst [vmem:[#allocation2 + $0x90] sm:$0xff] %v1272
        %1337 = vst [vmem:[#allocation2 + $0x98] sm:$0xff] %v1273
        %1338 = vst [vmem:[#allocation2 + $0xa0] sm:$0xff] %v1274
        %1339 = vst [vmem:[#allocation2 + $0xa8] sm:$0xff] %v1275
        %1340 = vst [vmem:[#allocation2 + $0xb0] sm:$0xff] %v1276
        %1341 = vst [vmem:[#allocation2 + $0xb8] sm:$0xff] %v1277
        %1342 = vst [vmem:[#allocation2 + $0xc0] sm:$0xff] %v1278
        %1343 = vst [vmem:[#allocation2 + $0xc8] sm:$0xff] %v1279
        %1344 = vst [vmem:[#allocation2 + $0xd0] sm:$0xff] %v1280
        %1345 = vst [vmem:[#allocation2 + $0xd8] sm:$0xff] %v1281
        %1346 = vst [vmem:[#allocation2 + $0xe0] sm:$0xff] %v1282
        %1347 = vst [vmem:[#allocation2 + $0xe8] sm:$0xff] %v1283
        %1348 = vst [vmem:[#allocation2 + $0xf0] sm:$0xff] %v1284
        %1349 = vst [vmem:[#allocation2 + $0xf8] sm:$0xff] %v1285
        %1350 = vst [vmem:[#allocation2 + $0x100] sm:$0xff] %v1286
        %1351 = vst [vmem:[#allocation2 + $0x108] sm:$0xff] %v1287
        %1352 = vst [vmem:[#allocation2 + $0x110] sm:$0xff] %v1288
        %1353 = vst [vmem:[#allocation2 + $0x118] sm:$0xff] %v1289
        %1354 = vst [vmem:[#allocation2 + $0x120] sm:$0xff] %v1290
        %1355 = vst [vmem:[#allocation2 + $0x128] sm:$0xff] %v1291
        %1356 = vst [vmem:[#allocation2 + $0x130] sm:$0xff] %v1292
        %1357 = vst [vmem:[#allocation2 + $0x138] sm:$0xff] %v1293
        %1358 = vst [vmem:[#allocation2 + $0x140] sm:$0xff] %v1294
        %1359 = vst [vmem:[#allocation2 + $0x148] sm:$0xff] %v1295
        %1360 = vst [vmem:[#allocation2 + $0x150] sm:$0xff] %v1296
        %1361 = vst [vmem:[#allocation2 + $0x158] sm:$0xff] %v1297
        %1362 = vst [vmem:[#allocation2 + $0x160] sm:$0xff] %v1298
        %1363 = vst [vmem:[#allocation2 + $0x168] sm:$0xff] %v1299
        %1364 = vst [vmem:[#allocation2 + $0x170] sm:$0xff] %v1300
        %1365 = vst [vmem:[#allocation2 + $0x178] sm:$0xff] %v1301
        %1366 = vst [vmem:[#allocation2 + $0x180] sm:$0xff] %v1302
        %1367 = vst [vmem:[#allocation2 + $0x188] sm:$0xff] %v1303
        %1368 = vst [vmem:[#allocation2 + $0x190] sm:$0xff] %v1304
        %1369 = vst [vmem:[#allocation2 + $0x198] sm:$0xff] %v1305
        %1370 = vst [vmem:[#allocation2 + $0x1a0] sm:$0xff] %v1306
        %1371 = vst [vmem:[#allocation2 + $0x1a8] sm:$0xff] %v1307
        %1372 = vst [vmem:[#allocation2 + $0x1b0] sm:$0xff] %v1308
        %1373 = vst [vmem:[#allocation2 + $0x1b8] sm:$0xff] %v1309
        %1374 = vst [vmem:[#allocation2 + $0x1c0] sm:$0xff] %v1310
        %1375 = vst [vmem:[#allocation2 + $0x1c8] sm:$0xff] %v1311
        %1376 = vst [vmem:[#allocation2 + $0x1d0] sm:$0xff] %v1312
        %1377 = vst [vmem:[#allocation2 + $0x1d8] sm:$0xff] %v1313
        %1378 = vst [vmem:[#allocation2 + $0x1e0] sm:$0xff] %v1314
        %1379 = vst [vmem:[#allocation2 + $0x1e8] sm:$0xff] %v1315
        %1380 = vst [vmem:[#allocation2 + $0x1f0] sm:$0xff] %v1316
        %1381 = vst [vmem:[#allocation2 + $0x1f8] sm:$0xff] %v1317
        // Predicated region
        $region41: #{tpu_custom_call.1} parent=35 // pred_check
          %p1382 = pneg %p301
        $region42: #{tpu_custom_call.1} parent=35 // pred_check_branch
          %1384 = sbr.rel (%p1382) target = $region44
        $region43: #{tpu_custom_call.1} parent=35 // pred_region
          %v1385 = vld [vmem:[#allocation2] sm:$0xff]
          %v1386 = vld [vmem:[#allocation2 + $0x8] sm:$0xff]
          %v1387 = vld [vmem:[#allocation2 + $0x10] sm:$0xff]
          %v1388 = vld [vmem:[#allocation2 + $0x18] sm:$0xff]
          %v1389 = vld [vmem:[#allocation2 + $0x20] sm:$0xff]
          %v1390 = vld [vmem:[#allocation2 + $0x28] sm:$0xff]
          %v1391 = vld [vmem:[#allocation2 + $0x30] sm:$0xff]
          %v1392 = vld [vmem:[#allocation2 + $0x38] sm:$0xff]
          %v1393 = vld [vmem:[#allocation2 + $0x40] sm:$0xff]
          %v1394 = vld [vmem:[#allocation2 + $0x48] sm:$0xff]
          %v1395 = vld [vmem:[#allocation2 + $0x50] sm:$0xff]
          %v1396 = vld [vmem:[#allocation2 + $0x58] sm:$0xff]
          %v1397 = vld [vmem:[#allocation2 + $0x60] sm:$0xff]
          %v1398 = vld [vmem:[#allocation2 + $0x68] sm:$0xff]
          %v1399 = vld [vmem:[#allocation2 + $0x70] sm:$0xff]
          %v1400 = vld [vmem:[#allocation2 + $0x78] sm:$0xff]
          %v1401 = vld [vmem:[#allocation2 + $0x80] sm:$0xff]
          %v1402 = vld [vmem:[#allocation2 + $0x88] sm:$0xff]
          %v1403 = vld [vmem:[#allocation2 + $0x90] sm:$0xff]
          %v1404 = vld [vmem:[#allocation2 + $0x98] sm:$0xff]
          %v1405 = vld [vmem:[#allocation2 + $0xa0] sm:$0xff]
          %v1406 = vld [vmem:[#allocation2 + $0xa8] sm:$0xff]
          %v1407 = vld [vmem:[#allocation2 + $0xb0] sm:$0xff]
          %v1408 = vld [vmem:[#allocation2 + $0xb8] sm:$0xff]
          %v1409 = vld [vmem:[#allocation2 + $0xc0] sm:$0xff]
          %v1410 = vld [vmem:[#allocation2 + $0xc8] sm:$0xff]
          %v1411 = vld [vmem:[#allocation2 + $0xd0] sm:$0xff]
          %v1412 = vld [vmem:[#allocation2 + $0xd8] sm:$0xff]
          %v1413 = vld [vmem:[#allocation2 + $0xe0] sm:$0xff]
          %v1414 = vld [vmem:[#allocation2 + $0xe8] sm:$0xff]
          %v1415 = vld [vmem:[#allocation2 + $0xf0] sm:$0xff]
          %v1416 = vld [vmem:[#allocation2 + $0xf8] sm:$0xff]
          %v1417 = vld [vmem:[#allocation2 + $0x100] sm:$0xff]
          %v1418 = vld [vmem:[#allocation2 + $0x108] sm:$0xff]
          %v1419 = vld [vmem:[#allocation2 + $0x110] sm:$0xff]
          %v1420 = vld [vmem:[#allocation2 + $0x118] sm:$0xff]
          %v1421 = vld [vmem:[#allocation2 + $0x120] sm:$0xff]
          %v1422 = vld [vmem:[#allocation2 + $0x128] sm:$0xff]
          %v1423 = vld [vmem:[#allocation2 + $0x130] sm:$0xff]
          %v1424 = vld [vmem:[#allocation2 + $0x138] sm:$0xff]
          %v1425 = vld [vmem:[#allocation2 + $0x140] sm:$0xff]
          %v1426 = vld [vmem:[#allocation2 + $0x148] sm:$0xff]
          %v1427 = vld [vmem:[#allocation2 + $0x150] sm:$0xff]
          %v1428 = vld [vmem:[#allocation2 + $0x158] sm:$0xff]
          %v1429 = vld [vmem:[#allocation2 + $0x160] sm:$0xff]
          %v1430 = vld [vmem:[#allocation2 + $0x168] sm:$0xff]
          %v1431 = vld [vmem:[#allocation2 + $0x170] sm:$0xff]
          %v1432 = vld [vmem:[#allocation2 + $0x178] sm:$0xff]
          %v1433 = vld [vmem:[#allocation2 + $0x180] sm:$0xff]
          %v1434 = vld [vmem:[#allocation2 + $0x188] sm:$0xff]
          %v1435 = vld [vmem:[#allocation2 + $0x190] sm:$0xff]
          %v1436 = vld [vmem:[#allocation2 + $0x198] sm:$0xff]
          %v1437 = vld [vmem:[#allocation2 + $0x1a0] sm:$0xff]
          %v1438 = vld [vmem:[#allocation2 + $0x1a8] sm:$0xff]
          %v1439 = vld [vmem:[#allocation2 + $0x1b0] sm:$0xff]
          %v1440 = vld [vmem:[#allocation2 + $0x1b8] sm:$0xff]
          %v1441 = vld [vmem:[#allocation2 + $0x1c0] sm:$0xff]
          %v1442 = vld [vmem:[#allocation2 + $0x1c8] sm:$0xff]
          %v1443 = vld [vmem:[#allocation2 + $0x1d0] sm:$0xff]
          %v1444 = vld [vmem:[#allocation2 + $0x1d8] sm:$0xff]
          %v1445 = vld [vmem:[#allocation2 + $0x1e0] sm:$0xff]
          %v1446 = vld [vmem:[#allocation2 + $0x1e8] sm:$0xff]
          %v1447 = vld [vmem:[#allocation2 + $0x1f0] sm:$0xff]
          %v1448 = vld [vmem:[#allocation2 + $0x1f8] sm:$0xff]
          %v1449 = vld [vmem:[%s295] sm:$0x1]
          %v1451 = vlaneseq
          %v1452 = vshrl.u32 %v1451, 7
          %v1453 = vsub.s32 0, %v1452
          %v1454 = vrot.slane %v1449, %v1453
          %v1456 = vmul.f32 %v1385, %v1454
          %v1457 = vmul.f32 %v1386, %v1454
          %v1458 = vmul.f32 %v1387, %v1454
          %v1459 = vmul.f32 %v1388, %v1454
          %v1460 = vmul.f32 %v1389, %v1454
          %v1461 = vmul.f32 %v1390, %v1454
          %v1462 = vmul.f32 %v1391, %v1454
          %v1463 = vmul.f32 %v1392, %v1454
          %v1464 = vmul.f32 %v1393, %v1454
          %v1465 = vmul.f32 %v1394, %v1454
          %v1466 = vmul.f32 %v1395, %v1454
          %v1467 = vmul.f32 %v1396, %v1454
          %v1468 = vmul.f32 %v1397, %v1454
          %v1469 = vmul.f32 %v1398, %v1454
          %v1470 = vmul.f32 %v1399, %v1454
          %v1471 = vmul.f32 %v1400, %v1454
          %v1472 = vmul.f32 %v1401, %v1454
          %v1473 = vmul.f32 %v1402, %v1454
          %v1474 = vmul.f32 %v1403, %v1454
          %v1475 = vmul.f32 %v1404, %v1454
          %v1476 = vmul.f32 %v1405, %v1454
          %v1477 = vmul.f32 %v1406, %v1454
          %v1478 = vmul.f32 %v1407, %v1454
          %v1479 = vmul.f32 %v1408, %v1454
          %v1480 = vmul.f32 %v1409, %v1454
          %v1481 = vmul.f32 %v1410, %v1454
          %v1482 = vmul.f32 %v1411, %v1454
          %v1483 = vmul.f32 %v1412, %v1454
          %v1484 = vmul.f32 %v1413, %v1454
          %v1485 = vmul.f32 %v1414, %v1454
          %v1486 = vmul.f32 %v1415, %v1454
          %v1487 = vmul.f32 %v1416, %v1454
          %v1488 = vmul.f32 %v1417, %v1454
          %v1489 = vmul.f32 %v1418, %v1454
          %v1490 = vmul.f32 %v1419, %v1454
          %v1491 = vmul.f32 %v1420, %v1454
          %v1492 = vmul.f32 %v1421, %v1454
          %v1493 = vmul.f32 %v1422, %v1454
          %v1494 = vmul.f32 %v1423, %v1454
          %v1495 = vmul.f32 %v1424, %v1454
          %v1496 = vmul.f32 %v1425, %v1454
          %v1497 = vmul.f32 %v1426, %v1454
          %v1498 = vmul.f32 %v1427, %v1454
          %v1499 = vmul.f32 %v1428, %v1454
          %v1500 = vmul.f32 %v1429, %v1454
          %v1501 = vmul.f32 %v1430, %v1454
          %v1502 = vmul.f32 %v1431, %v1454
          %v1503 = vmul.f32 %v1432, %v1454
          %v1504 = vmul.f32 %v1433, %v1454
          %v1505 = vmul.f32 %v1434, %v1454
          %v1506 = vmul.f32 %v1435, %v1454
          %v1507 = vmul.f32 %v1436, %v1454
          %v1508 = vmul.f32 %v1437, %v1454
          %v1509 = vmul.f32 %v1438, %v1454
          %v1510 = vmul.f32 %v1439, %v1454
          %v1511 = vmul.f32 %v1440, %v1454
          %v1512 = vmul.f32 %v1441, %v1454
          %v1513 = vmul.f32 %v1442, %v1454
          %v1514 = vmul.f32 %v1443, %v1454
          %v1515 = vmul.f32 %v1444, %v1454
          %v1516 = vmul.f32 %v1445, %v1454
          %v1517 = vmul.f32 %v1446, %v1454
          %v1518 = vmul.f32 %v1447, %v1454
          %v1519 = vmul.f32 %v1448, %v1454
          %v1520 = vld [vmem:[%s298] sm:$0x1]
          %v1522 = vlaneseq
          %v1523 = vshrl.u32 %v1522, 7
          %v1524 = vsub.s32 0, %v1523
          %v1525 = vrot.slane %v1520, %v1524
          %v1527 = vadd.f32 %v1456, %v1525
          %v1528 = vadd.f32 %v1457, %v1525
          %v1529 = vadd.f32 %v1458, %v1525
          %v1530 = vadd.f32 %v1459, %v1525
          %v1531 = vadd.f32 %v1460, %v1525
          %v1532 = vadd.f32 %v1461, %v1525
          %v1533 = vadd.f32 %v1462, %v1525
          %v1534 = vadd.f32 %v1463, %v1525
          %v1535 = vadd.f32 %v1464, %v1525
          %v1536 = vadd.f32 %v1465, %v1525
          %v1537 = vadd.f32 %v1466, %v1525
          %v1538 = vadd.f32 %v1467, %v1525
          %v1539 = vadd.f32 %v1468, %v1525
          %v1540 = vadd.f32 %v1469, %v1525
          %v1541 = vadd.f32 %v1470, %v1525
          %v1542 = vadd.f32 %v1471, %v1525
          %v1543 = vadd.f32 %v1472, %v1525
          %v1544 = vadd.f32 %v1473, %v1525
          %v1545 = vadd.f32 %v1474, %v1525
          %v1546 = vadd.f32 %v1475, %v1525
          %v1547 = vadd.f32 %v1476, %v1525
          %v1548 = vadd.f32 %v1477, %v1525
          %v1549 = vadd.f32 %v1478, %v1525
          %v1550 = vadd.f32 %v1479, %v1525
          %v1551 = vadd.f32 %v1480, %v1525
          %v1552 = vadd.f32 %v1481, %v1525
          %v1553 = vadd.f32 %v1482, %v1525
          %v1554 = vadd.f32 %v1483, %v1525
          %v1555 = vadd.f32 %v1484, %v1525
          %v1556 = vadd.f32 %v1485, %v1525
          %v1557 = vadd.f32 %v1486, %v1525
          %v1558 = vadd.f32 %v1487, %v1525
          %v1559 = vadd.f32 %v1488, %v1525
          %v1560 = vadd.f32 %v1489, %v1525
          %v1561 = vadd.f32 %v1490, %v1525
          %v1562 = vadd.f32 %v1491, %v1525
          %v1563 = vadd.f32 %v1492, %v1525
          %v1564 = vadd.f32 %v1493, %v1525
          %v1565 = vadd.f32 %v1494, %v1525
          %v1566 = vadd.f32 %v1495, %v1525
          %v1567 = vadd.f32 %v1496, %v1525
          %v1568 = vadd.f32 %v1497, %v1525
          %v1569 = vadd.f32 %v1498, %v1525
          %v1570 = vadd.f32 %v1499, %v1525
          %v1571 = vadd.f32 %v1500, %v1525
          %v1572 = vadd.f32 %v1501, %v1525
          %v1573 = vadd.f32 %v1502, %v1525
          %v1574 = vadd.f32 %v1503, %v1525
          %v1575 = vadd.f32 %v1504, %v1525
          %v1576 = vadd.f32 %v1505, %v1525
          %v1577 = vadd.f32 %v1506, %v1525
          %v1578 = vadd.f32 %v1507, %v1525
          %v1579 = vadd.f32 %v1508, %v1525
          %v1580 = vadd.f32 %v1509, %v1525
          %v1581 = vadd.f32 %v1510, %v1525
          %v1582 = vadd.f32 %v1511, %v1525
          %v1583 = vadd.f32 %v1512, %v1525
          %v1584 = vadd.f32 %v1513, %v1525
          %v1585 = vadd.f32 %v1514, %v1525
          %v1586 = vadd.f32 %v1515, %v1525
          %v1587 = vadd.f32 %v1516, %v1525
          %v1588 = vadd.f32 %v1517, %v1525
          %v1589 = vadd.f32 %v1518, %v1525
          %v1590 = vadd.f32 %v1519, %v1525
          %v1591 = vmax.f32 %v1527, 0.0
          %v1592 = vmax.f32 %v1528, 0.0
          %v1593 = vmax.f32 %v1529, 0.0
          %v1594 = vmax.f32 %v1530, 0.0
          %v1595 = vmax.f32 %v1531, 0.0
          %v1596 = vmax.f32 %v1532, 0.0
          %v1597 = vmax.f32 %v1533, 0.0
          %v1598 = vmax.f32 %v1534, 0.0
          %v1599 = vmax.f32 %v1535, 0.0
          %v1600 = vmax.f32 %v1536, 0.0
          %v1601 = vmax.f32 %v1537, 0.0
          %v1602 = vmax.f32 %v1538, 0.0
          %v1603 = vmax.f32 %v1539, 0.0
          %v1604 = vmax.f32 %v1540, 0.0
          %v1605 = vmax.f32 %v1541, 0.0
          %v1606 = vmax.f32 %v1542, 0.0
          %v1607 = vmax.f32 %v1543, 0.0
          %v1608 = vmax.f32 %v1544, 0.0
          %v1609 = vmax.f32 %v1545, 0.0
          %v1610 = vmax.f32 %v1546, 0.0
          %v1611 = vmax.f32 %v1547, 0.0
          %v1612 = vmax.f32 %v1548, 0.0
          %v1613 = vmax.f32 %v1549, 0.0
          %v1614 = vmax.f32 %v1550, 0.0
          %v1615 = vmax.f32 %v1551, 0.0
          %v1616 = vmax.f32 %v1552, 0.0
          %v1617 = vmax.f32 %v1553, 0.0
          %v1618 = vmax.f32 %v1554, 0.0
          %v1619 = vmax.f32 %v1555, 0.0
          %v1620 = vmax.f32 %v1556, 0.0
          %v1621 = vmax.f32 %v1557, 0.0
          %v1622 = vmax.f32 %v1558, 0.0
          %v1623 = vmax.f32 %v1559, 0.0
          %v1624 = vmax.f32 %v1560, 0.0
          %v1625 = vmax.f32 %v1561, 0.0
          %v1626 = vmax.f32 %v1562, 0.0
          %v1627 = vmax.f32 %v1563, 0.0
          %v1628 = vmax.f32 %v1564, 0.0
          %v1629 = vmax.f32 %v1565, 0.0
          %v1630 = vmax.f32 %v1566, 0.0
          %v1631 = vmax.f32 %v1567, 0.0
          %v1632 = vmax.f32 %v1568, 0.0
          %v1633 = vmax.f32 %v1569, 0.0
          %v1634 = vmax.f32 %v1570, 0.0
          %v1635 = vmax.f32 %v1571, 0.0
          %v1636 = vmax.f32 %v1572, 0.0
          %v1637 = vmax.f32 %v1573, 0.0
          %v1638 = vmax.f32 %v1574, 0.0
          %v1639 = vmax.f32 %v1575, 0.0
          %v1640 = vmax.f32 %v1576, 0.0
          %v1641 = vmax.f32 %v1577, 0.0
          %v1642 = vmax.f32 %v1578, 0.0
          %v1643 = vmax.f32 %v1579, 0.0
          %v1644 = vmax.f32 %v1580, 0.0
          %v1645 = vmax.f32 %v1581, 0.0
          %v1646 = vmax.f32 %v1582, 0.0
          %v1647 = vmax.f32 %v1583, 0.0
          %v1648 = vmax.f32 %v1584, 0.0
          %v1649 = vmax.f32 %v1585, 0.0
          %v1650 = vmax.f32 %v1586, 0.0
          %v1651 = vmax.f32 %v1587, 0.0
          %v1652 = vmax.f32 %v1588, 0.0
          %v1653 = vmax.f32 %v1589, 0.0
          %v1654 = vmax.f32 %v1590, 0.0
          %v1655 = vpack.c.bf16 %v1592, %v1591
          %v1656 = vpack.c.bf16 %v1594, %v1593
          %v1657 = vpack.c.bf16 %v1596, %v1595
          %v1658 = vpack.c.bf16 %v1598, %v1597
          %v1659 = vpack.c.bf16 %v1600, %v1599
          %v1660 = vpack.c.bf16 %v1602, %v1601
          %v1661 = vpack.c.bf16 %v1604, %v1603
          %v1662 = vpack.c.bf16 %v1606, %v1605
          %v1663 = vpack.c.bf16 %v1608, %v1607
          %v1664 = vpack.c.bf16 %v1610, %v1609
          %v1665 = vpack.c.bf16 %v1612, %v1611
          %v1666 = vpack.c.bf16 %v1614, %v1613
          %v1667 = vpack.c.bf16 %v1616, %v1615
          %v1668 = vpack.c.bf16 %v1618, %v1617
          %v1669 = vpack.c.bf16 %v1620, %v1619
          %v1670 = vpack.c.bf16 %v1622, %v1621
          %v1671 = vpack.c.bf16 %v1624, %v1623
          %v1672 = vpack.c.bf16 %v1626, %v1625
          %v1673 = vpack.c.bf16 %v1628, %v1627
          %v1674 = vpack.c.bf16 %v1630, %v1629
          %v1675 = vpack.c.bf16 %v1632, %v1631
          %v1676 = vpack.c.bf16 %v1634, %v1633
          %v1677 = vpack.c.bf16 %v1636, %v1635
          %v1678 = vpack.c.bf16 %v1638, %v1637
          %v1679 = vpack.c.bf16 %v1640, %v1639
          %v1680 = vpack.c.bf16 %v1642, %v1641
          %v1681 = vpack.c.bf16 %v1644, %v1643
          %v1682 = vpack.c.bf16 %v1646, %v1645
          %v1683 = vpack.c.bf16 %v1648, %v1647
          %v1684 = vpack.c.bf16 %v1650, %v1649
          %v1685 = vpack.c.bf16 %v1652, %v1651
          %v1686 = vpack.c.bf16 %v1654, %v1653
          %v1719 = vunpack.c.l.b16 %v1655
          %v1720 = vunpack.c.h.b16 %v1655
          %v1721 = vunpack.c.l.b16 %v1656
          %v1722 = vunpack.c.h.b16 %v1656
          %v1723 = vunpack.c.l.b16 %v1657
          %v1724 = vunpack.c.h.b16 %v1657
          %v1725 = vunpack.c.l.b16 %v1658
          %v1726 = vunpack.c.h.b16 %v1658
          %v1727 = vunpack.c.l.b16 %v1659
          %v1728 = vunpack.c.h.b16 %v1659
          %v1729 = vunpack.c.l.b16 %v1660
          %v1730 = vunpack.c.h.b16 %v1660
          %v1731 = vunpack.c.l.b16 %v1661
          %v1732 = vunpack.c.h.b16 %v1661
          %v1733 = vunpack.c.l.b16 %v1662
          %v1734 = vunpack.c.h.b16 %v1662
          %v1735 = vunpack.c.l.b16 %v1663
          %v1736 = vunpack.c.h.b16 %v1663
          %v1737 = vunpack.c.l.b16 %v1664
          %v1738 = vunpack.c.h.b16 %v1664
          %v1739 = vunpack.c.l.b16 %v1665
          %v1740 = vunpack.c.h.b16 %v1665
          %v1741 = vunpack.c.l.b16 %v1666
          %v1742 = vunpack.c.h.b16 %v1666
          %v1743 = vunpack.c.l.b16 %v1667
          %v1744 = vunpack.c.h.b16 %v1667
          %v1745 = vunpack.c.l.b16 %v1668
          %v1746 = vunpack.c.h.b16 %v1668
          %v1747 = vunpack.c.l.b16 %v1669
          %v1748 = vunpack.c.h.b16 %v1669
          %v1749 = vunpack.c.l.b16 %v1670
          %v1750 = vunpack.c.h.b16 %v1670
          %v1751 = vunpack.c.l.b16 %v1671
          %v1752 = vunpack.c.h.b16 %v1671
          %v1753 = vunpack.c.l.b16 %v1672
          %v1754 = vunpack.c.h.b16 %v1672
          %v1755 = vunpack.c.l.b16 %v1673
          %v1756 = vunpack.c.h.b16 %v1673
          %v1757 = vunpack.c.l.b16 %v1674
          %v1758 = vunpack.c.h.b16 %v1674
          %v1759 = vunpack.c.l.b16 %v1675
          %v1760 = vunpack.c.h.b16 %v1675
          %v1761 = vunpack.c.l.b16 %v1676
          %v1762 = vunpack.c.h.b16 %v1676
          %v1763 = vunpack.c.l.b16 %v1677
          %v1764 = vunpack.c.h.b16 %v1677
          %v1765 = vunpack.c.l.b16 %v1678
          %v1766 = vunpack.c.h.b16 %v1678
          %v1767 = vunpack.c.l.b16 %v1679
          %v1768 = vunpack.c.h.b16 %v1679
          %v1769 = vunpack.c.l.b16 %v1680
          %v1770 = vunpack.c.h.b16 %v1680
          %v1771 = vunpack.c.l.b16 %v1681
          %v1772 = vunpack.c.h.b16 %v1681
          %v1773 = vunpack.c.l.b16 %v1682
          %v1774 = vunpack.c.h.b16 %v1682
          %v1775 = vunpack.c.l.b16 %v1683
          %v1776 = vunpack.c.h.b16 %v1683
          %v1777 = vunpack.c.l.b16 %v1684
          %v1778 = vunpack.c.h.b16 %v1684
          %v1779 = vunpack.c.l.b16 %v1685
          %v1780 = vunpack.c.h.b16 %v1685
          %v1781 = vunpack.c.l.b16 %v1686
          %v1782 = vunpack.c.h.b16 %v1686
          %v1783 = vpack.c.b16 %v1719, %v1719
          %v1784 = vpack.c.b16 %v1720, %v1720
          %v1785 = vpack.c.b16 %v1721, %v1721
          %v1786 = vpack.c.b16 %v1722, %v1722
          %v1787 = vpack.c.b16 %v1723, %v1723
          %v1788 = vpack.c.b16 %v1724, %v1724
          %v1789 = vpack.c.b16 %v1725, %v1725
          %v1790 = vpack.c.b16 %v1726, %v1726
          %v1791 = vpack.c.b16 %v1727, %v1727
          %v1792 = vpack.c.b16 %v1728, %v1728
          %v1793 = vpack.c.b16 %v1729, %v1729
          %v1794 = vpack.c.b16 %v1730, %v1730
          %v1795 = vpack.c.b16 %v1731, %v1731
          %v1796 = vpack.c.b16 %v1732, %v1732
          %v1797 = vpack.c.b16 %v1733, %v1733
          %v1798 = vpack.c.b16 %v1734, %v1734
          %v1799 = vpack.c.b16 %v1735, %v1735
          %v1800 = vpack.c.b16 %v1736, %v1736
          %v1801 = vpack.c.b16 %v1737, %v1737
          %v1802 = vpack.c.b16 %v1738, %v1738
          %v1803 = vpack.c.b16 %v1739, %v1739
          %v1804 = vpack.c.b16 %v1740, %v1740
          %v1805 = vpack.c.b16 %v1741, %v1741
          %v1806 = vpack.c.b16 %v1742, %v1742
          %v1807 = vpack.c.b16 %v1743, %v1743
          %v1808 = vpack.c.b16 %v1744, %v1744
          %v1809 = vpack.c.b16 %v1745, %v1745
          %v1810 = vpack.c.b16 %v1746, %v1746
          %v1811 = vpack.c.b16 %v1747, %v1747
          %v1812 = vpack.c.b16 %v1748, %v1748
          %v1813 = vpack.c.b16 %v1749, %v1749
          %v1814 = vpack.c.b16 %v1750, %v1750
          %v1815 = vpack.c.b16 %v1751, %v1751
          %v1816 = vpack.c.b16 %v1752, %v1752
          %v1817 = vpack.c.b16 %v1753, %v1753
          %v1818 = vpack.c.b16 %v1754, %v1754
          %v1819 = vpack.c.b16 %v1755, %v1755
          %v1820 = vpack.c.b16 %v1756, %v1756
          %v1821 = vpack.c.b16 %v1757, %v1757
          %v1822 = vpack.c.b16 %v1758, %v1758
          %v1823 = vpack.c.b16 %v1759, %v1759
          %v1824 = vpack.c.b16 %v1760, %v1760
          %v1825 = vpack.c.b16 %v1761, %v1761
          %v1826 = vpack.c.b16 %v1762, %v1762
          %v1827 = vpack.c.b16 %v1763, %v1763
          %v1828 = vpack.c.b16 %v1764, %v1764
          %v1829 = vpack.c.b16 %v1765, %v1765
          %v1830 = vpack.c.b16 %v1766, %v1766
          %v1831 = vpack.c.b16 %v1767, %v1767
          %v1832 = vpack.c.b16 %v1768, %v1768
          %v1833 = vpack.c.b16 %v1769, %v1769
          %v1834 = vpack.c.b16 %v1770, %v1770
          %v1835 = vpack.c.b16 %v1771, %v1771
          %v1836 = vpack.c.b16 %v1772, %v1772
          %v1837 = vpack.c.b16 %v1773, %v1773
          %v1838 = vpack.c.b16 %v1774, %v1774
          %v1839 = vpack.c.b16 %v1775, %v1775
          %v1840 = vpack.c.b16 %v1776, %v1776
          %v1841 = vpack.c.b16 %v1777, %v1777
          %v1842 = vpack.c.b16 %v1778, %v1778
          %v1843 = vpack.c.b16 %v1779, %v1779
          %v1844 = vpack.c.b16 %v1780, %v1780
          %v1845 = vpack.c.b16 %v1781, %v1781
          %v1846 = vpack.c.b16 %v1782, %v1782
          %1911 = vst [vmem:[%s271] sm:$0xf] %v1783
          %1912 = vst [vmem:[%s271 + $0x4] sm:$0xf] %v1784
          %1913 = vst [vmem:[%s271 + $0x8] sm:$0xf] %v1785
          %1914 = vst [vmem:[%s271 + $0xc] sm:$0xf] %v1786
          %1915 = vst [vmem:[%s271 + $0x10] sm:$0xf] %v1787
          %1916 = vst [vmem:[%s271 + $0x14] sm:$0xf] %v1788
          %1917 = vst [vmem:[%s271 + $0x18] sm:$0xf] %v1789
          %1918 = vst [vmem:[%s271 + $0x1c] sm:$0xf] %v1790
          %1919 = vst [vmem:[%s271 + $0x20] sm:$0xf] %v1791
          %1920 = vst [vmem:[%s271 + $0x24] sm:$0xf] %v1792
          %1921 = vst [vmem:[%s271 + $0x28] sm:$0xf] %v1793
          %1922 = vst [vmem:[%s271 + $0x2c] sm:$0xf] %v1794
          %1923 = vst [vmem:[%s271 + $0x30] sm:$0xf] %v1795
          %1924 = vst [vmem:[%s271 + $0x34] sm:$0xf] %v1796
          %1925 = vst [vmem:[%s271 + $0x38] sm:$0xf] %v1797
          %1926 = vst [vmem:[%s271 + $0x3c] sm:$0xf] %v1798
          %1927 = vst [vmem:[%s271 + $0x40] sm:$0xf] %v1799
          %1928 = vst [vmem:[%s271 + $0x44] sm:$0xf] %v1800
          %1929 = vst [vmem:[%s271 + $0x48] sm:$0xf] %v1801
          %1930 = vst [vmem:[%s271 + $0x4c] sm:$0xf] %v1802
          %1931 = vst [vmem:[%s271 + $0x50] sm:$0xf] %v1803
          %1932 = vst [vmem:[%s271 + $0x54] sm:$0xf] %v1804
          %1933 = vst [vmem:[%s271 + $0x58] sm:$0xf] %v1805
          %1934 = vst [vmem:[%s271 + $0x5c] sm:$0xf] %v1806
          %1935 = vst [vmem:[%s271 + $0x60] sm:$0xf] %v1807
          %1936 = vst [vmem:[%s271 + $0x64] sm:$0xf] %v1808
          %1937 = vst [vmem:[%s271 + $0x68] sm:$0xf] %v1809
          %1938 = vst [vmem:[%s271 + $0x6c] sm:$0xf] %v1810
          %1939 = vst [vmem:[%s271 + $0x70] sm:$0xf] %v1811
          %1940 = vst [vmem:[%s271 + $0x74] sm:$0xf] %v1812
          %1941 = vst [vmem:[%s271 + $0x78] sm:$0xf] %v1813
          %1942 = vst [vmem:[%s271 + $0x7c] sm:$0xf] %v1814
          %1943 = vst [vmem:[%s271 + $0x80] sm:$0xf] %v1815
          %1944 = vst [vmem:[%s271 + $0x84] sm:$0xf] %v1816
          %1945 = vst [vmem:[%s271 + $0x88] sm:$0xf] %v1817
          %1946 = vst [vmem:[%s271 + $0x8c] sm:$0xf] %v1818
          %1947 = vst [vmem:[%s271 + $0x90] sm:$0xf] %v1819
          %1948 = vst [vmem:[%s271 + $0x94] sm:$0xf] %v1820
          %1949 = vst [vmem:[%s271 + $0x98] sm:$0xf] %v1821
          %1950 = vst [vmem:[%s271 + $0x9c] sm:$0xf] %v1822
          %1951 = vst [vmem:[%s271 + $0xa0] sm:$0xf] %v1823
          %1952 = vst [vmem:[%s271 + $0xa4] sm:$0xf] %v1824
          %1953 = vst [vmem:[%s271 + $0xa8] sm:$0xf] %v1825
          %1954 = vst [vmem:[%s271 + $0xac] sm:$0xf] %v1826
          %1955 = vst [vmem:[%s271 + $0xb0] sm:$0xf] %v1827
          %1956 = vst [vmem:[%s271 + $0xb4] sm:$0xf] %v1828
          %1957 = vst [vmem:[%s271 + $0xb8] sm:$0xf] %v1829
          %1958 = vst [vmem:[%s271 + $0xbc] sm:$0xf] %v1830
          %1959 = vst [vmem:[%s271 + $0xc0] sm:$0xf] %v1831
          %1960 = vst [vmem:[%s271 + $0xc4] sm:$0xf] %v1832
          %1961 = vst [vmem:[%s271 + $0xc8] sm:$0xf] %v1833
          %1962 = vst [vmem:[%s271 + $0xcc] sm:$0xf] %v1834
          %1963 = vst [vmem:[%s271 + $0xd0] sm:$0xf] %v1835
          %1964 = vst [vmem:[%s271 + $0xd4] sm:$0xf] %v1836
          %1965 = vst [vmem:[%s271 + $0xd8] sm:$0xf] %v1837
          %1966 = vst [vmem:[%s271 + $0xdc] sm:$0xf] %v1838
          %1967 = vst [vmem:[%s271 + $0xe0] sm:$0xf] %v1839
          %1968 = vst [vmem:[%s271 + $0xe4] sm:$0xf] %v1840
          %1969 = vst [vmem:[%s271 + $0xe8] sm:$0xf] %v1841
          %1970 = vst [vmem:[%s271 + $0xec] sm:$0xf] %v1842
          %1971 = vst [vmem:[%s271 + $0xf0] sm:$0xf] %v1843
          %1972 = vst [vmem:[%s271 + $0xf4] sm:$0xf] %v1844
          %1973 = vst [vmem:[%s271 + $0xf8] sm:$0xf] %v1845
          %1974 = vst [vmem:[%s271 + $0xfc] sm:$0xf] %v1846
        $region44: #{tpu_custom_call.1} parent=35 // pred_fallthru
          _
        %s1975 = sand.u32 %s155, 1
        %s1976 = scalar_lea.sflag [#allocation4], %s1975
        %s1977 = sand.u32 %s155, 1
        %s1978 = smul.addr %s1977, 256
        %s1979 = scalar_lea.vmem [#allocation3], %s1978
        // Predicated region
        $region45: #{tpu_custom_call.1} parent=35 // pred_check
          %p1980 = pneg %p165
        $region46: #{tpu_custom_call.1} parent=35 // pred_check_branch
          %1982 = sbr.rel (%p1980) target = $region48
        $region47: #{tpu_custom_call.1} parent=35 // pred_region
          %s1983 = smul.u32 64, %s23
          %s1985 = ssub.s32 4096, 4096
          %1986 = vsyncadd %s1976, %s1985
          %s1987 = sadd.s32 %s24, %s1983
          %s1988 = smul.addr %s1987, 64
          %s1989 = scalar_lea.hbm %s4, %s1988
          %s1990 = sshll.u32 %s1979, 4
          %s1991 = int_to_ptr.vmem [resolvable:$true] %s1990
          %1996 = dma.vmem_to_hbm [thread:$0]  %s1991, 4096, %s1989, %s1976, 64, 64, 4
        $region48: #{tpu_custom_call.1} parent=35 // pred_fallthru
          _
      $region36: #{tpu_custom_call.1} parent=5 // pred_fallthru
        _
      %p1997 = scmp.le.s32.totalorder 2, %s13
      // Predicated region
      $region49: #{tpu_custom_call.1} parent=5 // pred_check
        %p1998 = pneg %p1997
      $region50: #{tpu_custom_call.1} parent=5 // pred_check_branch
        %2000 = sbr.rel (%p1998) target = $region52
      $region51: #{tpu_custom_call.1} parent=5 // pred_region
        %s2001 = ssub.s32 %s13, 2
        // Predicated region
        $region53: #{tpu_custom_call.1} parent=51 // pred_check
          %p2002 = pneg %p171
        $region54: #{tpu_custom_call.1} parent=51 // pred_check_branch
          %2004 = sbr.rel (%p2002) target = $region56
        $region55: #{tpu_custom_call.1} parent=51 // pred_region
          %s2005 = sand.u32 %s156, 1
          %s2006 = scalar_lea.sflag [#allocation4], %s2005
          %s2007 = sand.u32 %s156, 1
          %s2008 = smul.addr %s2007, 256
          %s2009 = scalar_lea.vmem [#allocation3], %s2008
          %2010 = dma.done %s2006, 4096
        $region56: #{tpu_custom_call.1} parent=51 // pred_fallthru
          _
      $region52: #{tpu_custom_call.1} parent=5 // pred_fallthru
        _
    $region6: #{tpu_custom_call.1} parent=1 // loop_footer
      %s17 = sadd.s32 1, %s13
    $region7: #{tpu_custom_call.1} parent=1 // loop_footer_branch
      %12 = sbr.rel target = $region3
    $region8: #{tpu_custom_call.1} parent=1 // loop_exit
      _
    %2011 = vsyncpa [#allocation4], 1
    %s2012 = scalar_lea.sflag [#allocation4], 1
    %2013 = vsyncpa %s2012, 1

</llo_original>
